<compile_context>
chip_gen: v6e
topology: v6e:2x2x1
jax: 0.10.0
libtpu: 0.0.40
codegen_flags: <defaults>
</compile_context>

<pallas_src>
from functools import partial

import jax
import jax.numpy as jnp
from jax.experimental import pallas as pl
from jax.experimental.pallas import tpu as pltpu

LANE = 128     # lane width (last-dim padding target)
SUBLANE = 8    # sublane width (second-to-last-dim padding target)

# (name, kind, activation) in forward order.  kind "gc" = GraphConvolution.
_LAYERS = (
    ("linear1",       "lin", None),
    ("gc1",           "gc",  None),
    ("linear_med1",   "lin", "leaky"),
    ("linear_med2",   "lin", "leaky"),
    ("linear_med3",   "lin", "leaky"),
    ("linear_med4",   "lin", "relu"),
    ("gconv_hidden0", "gc",  None),     # fused with residual + relu in kernel
    ("linear2",       "lin", None),
    ("gc2",           "gc",  None),
    ("linear3",       "lin", None),
)
_NLAYERS = len(_LAYERS)


def _round_up(x, m):
    return ((x + m - 1) // m) * m


def _pad2(x, rows, cols):
    r, c = x.shape
    return jnp.pad(x, ((0, rows - r), (0, cols - c)))


# ----------------------------------------------------------------------------
# Fused kernel builder (resident / streamed variants share all layer code)
# ----------------------------------------------------------------------------
def _build_kernel(logical_dims, *, stream, n_tiles):
    """logical_dims[i] = (fin, fout) (unpadded) of layer i in _LAYERS order."""
    f32, bf16 = jnp.float32, jnp.bfloat16
    n_in = 3 + 2 * _NLAYERS

    def kernel(*refs):
        x_ref, adj_ref, dis_ref = refs[0], refs[1], refs[2]
        prm = refs[3:n_in]
        o_ref = refs[n_in]
        if stream:
            adj_buf, dis_buf, dma_sem, agg_scratch = refs[n_in + 1:]

        def W(i):
            return prm[2 * i][...]        # bf16, zero-padded to (fin_p, fout_p)

        def B(i):
            return prm[2 * i + 1][...]    # f32, zero-padded to (1, fout_p)

        def linear(h, i, act=None):
            # f32 activations on the VPU; bf16 only at the MXU boundary.
            y = jnp.dot(h.astype(bf16), W(i), preferred_element_type=f32) + B(i)
            if act == "leaky":            # LeakyReLU(0.2)
                y = jnp.where(y > 0, y, 0.2 * y)
            elif act == "relu":
                y = jnp.maximum(y, 0.0)
            return y

        if stream:
            # adj_ref / dis_ref are HBM refs reshaped to (n_tiles, tm, n_pad).
            def aggregate(m_bf):
                """(adj * dis) @ m_bf, streaming row tiles of adj/dis from HBM
                through a double-buffered VMEM scratch (DMA overlaps MXU)."""
                fp = m_bf.shape[1]
                fs = agg_scratch.shape[2]

                def fetch(t, slot):
                    pltpu.make_async_copy(adj_ref.at[t], adj_buf.at[slot],
                                          dma_sem.at[0, slot]).start()
                    pltpu.make_async_copy(dis_ref.at[t], dis_buf.at[slot],
                                          dma_sem.at[1, slot]).start()

                fetch(0, 0)

                @pl.loop(0, n_tiles)
                def _(t):
                    slot = t & 1
                    pltpu.make_async_copy(adj_ref.at[0], adj_buf.at[slot],
                                          dma_sem.at[0, slot]).wait()
                    pltpu.make_async_copy(dis_ref.at[0], dis_buf.at[slot],
                                          dma_sem.at[1, slot]).wait()

                    @pl.when(t + 1 < n_tiles)
                    def _():
                        fetch(t + 1, 1 - slot)

                    # adj*dis stays f32 on the VPU; cast only for the MXU.
                    a_tile = (adj_buf[slot] * dis_buf[slot]).astype(bf16)
                    val = jnp.dot(a_tile, m_bf, preferred_element_type=f32)
                    if fp == fs:
                        agg_scratch[t] = val
                    else:
                        agg_scratch[t, :, 0:fp] = val

                out = agg_scratch[...].reshape(-1, fs)
                return out if fp == fs else out[:, 0:fp]
        else:
            # Whole (N, N) operands resident in VMEM: form adj*dis ONCE (f32
            # on the VPU), keep only the bf16 copy live for the 3 gc layers.
            a_bf = (adj_ref[...] * dis_ref[...]).astype(bf16)

            def aggregate(m_bf):
                return jnp.dot(a_bf, m_bf, preferred_element_type=f32)

        def gconv(h, i):
            fin, fout = logical_dims[i]
            w = W(i)
            # Contract the smaller LOGICAL width first (padding is monotone,
            # so this never picks a worse padded contraction).
            if fin <= fout:       # aggregate-first: ((adj*dis) @ h) @ W
                agg = aggregate(h.astype(bf16))
                y = jnp.dot(agg.astype(bf16), w, preferred_element_type=f32)
            else:                 # project-first:   (adj*dis) @ (h @ W)
                sup = jnp.dot(h.astype(bf16), w, preferred_element_type=f32)
                y = aggregate(sup.astype(bf16))
            return y + B(i)

        h = x_ref[...]
        h = linear(h, 0)                     # linear1
        h = gconv(h, 1)                      # gc1
        h = linear(h, 2, "leaky")            # linear_med1
        h = linear(h, 3, "leaky")            # linear_med2
        h = linear(h, 4, "leaky")            # linear_med3
        h = linear(h, 5, "relu")             # linear_med4
        h_res = h
        h = jnp.maximum(gconv(h, 6) + h_res, 0.0)   # gconv_hidden[0] + residual
        h = linear(h, 7)                     # linear2
        h = gconv(h, 8)                      # gc2
        h = linear(h, 9)                     # linear3
        o_ref[...] = h.astype(o_ref.dtype)

    return kernel


# ----------------------------------------------------------------------------
# Wrapper: pad, budget VMEM, pick resident/streamed path, single pallas_call
# ----------------------------------------------------------------------------
def gcn_d_forward(params, x, adj, dis, *, force_stream=None):
    """force_stream: None = auto (VMEM budget), True/False to force the
    streamed / resident path (trace-time choice)."""
    n, nfeat = x.shape
    nhid = params["linear3"][0].shape[1]

    # Node padding: lane-dense (128) once N is non-trivial, sublane (8) for tiny.
    n_pad = _round_up(n, LANE) if n > LANE else _round_up(max(n, SUBLANE), SUBLANE)
    out_pad = _round_up(nhid, LANE)
    nfeat_pad = _round_up(nfeat, LANE)

    # Pad & cast parameters: weights -> bf16 (MXU-native on v5e/v6e/v7x),
    # biases stay f32 (added after the f32 MXU accumulation).
    flat, logical_dims = [], []
    for name, _kind, _act in _LAYERS:
        w, b = params[name]
        fin, fout = int(w.shape[0]), int(w.shape[1])
        logical_dims.append((fin, fout))
        flat.append(_pad2(w.astype(jnp.float32), _round_up(fin, LANE),
                          _round_up(fout, LANE)).astype(jnp.bfloat16))
        flat.append(_pad2(b.reshape(1, -1).astype(jnp.float32), 1,
                          _round_up(fout, LANE)))

    x_p = _pad2(x.astype(jnp.float32), n_pad, nfeat_pad)
    adj_p = _pad2(adj.astype(jnp.float32), n_pad, n_pad)
    dis_p = _pad2(dis.astype(jnp.float32), n_pad, n_pad)

    # Widest feature block that ever flows through the streamed aggregation.
    fs = LANE
    for (_name, kind, _), (fin, fout) in zip(_LAYERS, logical_dims):
        if kind == "gc":
            fs = max(fs, _round_up(fin if fin <= fout else fout, LANE))

    # --- generation-aware VMEM budgeting (v5e/v6e: 128 MiB, v7x: 64 MiB) -----
    try:
        vmem_cap = int(getattr(pltpu.get_tpu_info(), "vmem_capacity_bytes",
                               64 << 20))
    except Exception:
        vmem_cap = 64 << 20      # conservative fallback (v7x per-core VMEM)

    max_feat_pad = max([nfeat_pad, out_pad, fs]
                       + [_round_up(d, LANE) for fd in logical_dims for d in fd])
    w_bytes = sum(int(a.size) * a.dtype.itemsize for a in flat)
    io_bytes = (int(x_p.size) + n_pad * out_pad) * 4
    act_bytes = 8 * n_pad * max_feat_pad * 4          # live activations (rough)
    resident_need = n_pad * n_pad * (4 + 4 + 2) + act_bytes + w_bytes + io_bytes

    stream = (resident_need > int(0.70 * vmem_cap)) if force_stream is None \
        else bool(force_stream)

    # Row-tile size for the streamed path (must divide n_pad).
    if n_pad % 256 == 0:
        tm = 256
    elif n_pad % LANE == 0:
        tm = LANE
    else:
        tm = SUBLANE
    n_tiles = n_pad // tm

    if stream:
        need = (2 * 2 * tm * n_pad * 4          # double-buffered adj/dis tiles
                + n_pad * fs * 4                # aggregation scratch
                + act_bytes + w_bytes + io_bytes)
    else:
        need = resident_need
    vmem_limit = int(min(vmem_cap, max(32 << 20, int(1.4 * need) + (2 << 20))))

    # --- advisory cost estimate (helps XLA schedule around the kernel) -------
    flops = 0
    for (_name, kind, _), (fin, fout) in zip(_LAYERS, logical_dims):
        finp, foutp = _round_up(fin, LANE), _round_up(fout, LANE)
        flops += 2 * n_pad * finp * foutp
        if kind == "gc":
            flops += 2 * n_pad * n_pad * (finp if fin <= fout else foutp)
    nn_reads = 3 if stream else 1    # streamed path re-reads adj/dis per gc layer
    bytes_accessed = (int(x_p.size) * 4 + nn_reads * 2 * n_pad * n_pad * 4
                      + w_bytes + n_pad * out_pad * 4)

    vmem = pl.BlockSpec(memory_space=pltpu.MemorySpace.VMEM)
    hbm = pl.BlockSpec(memory_space=pl.ANY)
    in_specs = ([vmem, hbm, hbm] if stream else [vmem, vmem, vmem]) \
        + [vmem] * (2 * _NLAYERS)

    scratch_shapes = []
    if stream:
        adj_p = adj_p.reshape(n_tiles, tm, n_pad)
        dis_p = dis_p.reshape(n_tiles, tm, n_pad)
        scratch_shapes = [
            pltpu.VMEM((2, tm, n_pad), jnp.float32),     # adj tiles (dbl buffer)
            pltpu.VMEM((2, tm, n_pad), jnp.float32),     # dis tiles (dbl buffer)
            pltpu.SemaphoreType.DMA((2, 2)),
            pltpu.VMEM((n_tiles, tm, fs), jnp.float32),  # aggregation result
        ]

    kernel = _build_kernel(tuple(logical_dims), stream=stream, n_tiles=n_tiles)

    out_p = pl.pallas_call(
        kernel,
        out_shape=jax.ShapeDtypeStruct((n_pad, out_pad), jnp.float32),
        in_specs=in_specs,
        out_specs=vmem,
        scratch_shapes=scratch_shapes,
        compiler_params=pltpu.CompilerParams(vmem_limit_bytes=vmem_limit),
        cost_estimate=pl.CostEstimate(flops=int(flops), transcendentals=0,
                                      bytes_accessed=int(bytes_accessed)),
    )(x_p, adj_p, dis_p, *flat)

    return out_p[:n, :nhid]


# ----------------------------------------------------------------------------
# Parameter construction (deterministic, synthetic)
# ----------------------------------------------------------------------------
def _init_linear(key, fin, fout):
    """Returns (W[in,out], b[1,out]) — W already transposed vs nn.Linear."""
    kw, kb = jax.random.split(key)
    scale = 1.0 / jnp.sqrt(jnp.float32(fin))
    w = jax.random.uniform(kw, (fin, fout), jnp.float32, -scale, scale)
    b = jax.random.uniform(kb, (1, fout), jnp.float32, -scale, scale)
    return w, b


def init_gcn_d_params(key, infeature, nfeat, nhid):
    dims = {
        "linear1": (nfeat, nfeat),
        "gc1": (nfeat, infeature),
        "linear_med1": (infeature, 64),
        "linear_med2": (64, 128),
        "linear_med3": (128, 64),
        "linear_med4": (64, 64),
        "gconv_hidden0": (64, 64),
        "linear2": (64, 32),
        "gc2": (32, 32),
        "linear3": (32, nhid),
    }
    keys = jax.random.split(key, len(dims))
    return {name: _init_linear(k, fin, fout)
            for k, (name, (fin, fout)) in zip(keys, dims.items())}


# ----------------------------------------------------------------------------
# Pure-JAX (exact f32) reference for a sanity check
# ----------------------------------------------------------------------------
def gcn_d_reference(params, x, adj, dis):
    def lin(h, wb, act="none"):
        w, b = wb
        y = h @ w + b
        if act == "leaky":
            y = jnp.where(y > 0, y, 0.2 * y)
        elif act == "relu":
            y = jnp.maximum(y, 0.0)
        return y

    def gc(h, wb):
        w, b = wb
        return (adj * dis) @ (h @ w) + b

    p = params
    x0 = lin(x, p["linear1"])
    x0 = gc(x0, p["gc1"])
    x0 = lin(x0, p["linear_med1"], "leaky")
    x0 = lin(x0, p["linear_med2"], "leaky")
    x0 = lin(x0, p["linear_med3"], "leaky")
    x0 = lin(x0, p["linear_med4"], "relu")
    x_res = x0
    x0 = jnp.maximum(gc(x0, p["gconv_hidden0"]) + x_res, 0.0)
    x0 = lin(x0, p["linear2"])
    x0 = gc(x0, p["gc2"])
    x0 = lin(x0, p["linear3"])
    return x0


if __name__ == "__main__":
    # Small, deterministic problem: N=16 nodes, nfeat=16, infeature=32, nhid=8
    N, NFEAT, INFEATURE, NHID = 16, 16, 32, 8

    key = jax.random.PRNGKey(0)
    k_param, k_x, k_adj, k_dis = jax.random.split(key, 4)

    params = init_gcn_d_params(k_param, INFEATURE, NFEAT, NHID)

    x = jax.random.normal(k_x, (N, NFEAT), jnp.float32)
    # Symmetric 0/1 adjacency with self loops, row-normalized.
    a = (jax.random.uniform(k_adj, (N, N)) > 0.6).astype(jnp.float32)
    adj = jnp.clip(a + a.T + jnp.eye(N, dtype=jnp.float32), 0.0, 1.0)
    adj = adj / jnp.sum(adj, axis=1, keepdims=True)
    dis = jax.random.uniform(k_dis, (N, N), jnp.float32, 0.1, 1.0)

    ref = jax.block_until_ready(gcn_d_reference(params, x, adj, dis))

    # Exercise BOTH code paths: VMEM-resident and HBM-streamed adj/dis.
    fwd_resident = jax.jit(partial(gcn_d_forward, force_stream=False))
    fwd_stream = jax.jit(partial(gcn_d_forward, force_stream=True))

    out_r = jax.block_until_ready(fwd_resident(params, x, adj, dis))
    out_s = jax.block_until_ready(fwd_stream(params, x, adj, dis))

    assert out_r.shape == (N, NHID), out_r.shape
    assert out_s.shape == (N, NHID), out_s.shape
    # bf16 MXU operands (f32 accumulation) vs pure-f32 reference => loose tol.
    assert jnp.allclose(out_r, ref, atol=5e-2, rtol=5e-2), "resident path mismatch"
    assert jnp.allclose(out_s, ref, atol=5e-2, rtol=5e-2), "streamed path mismatch"
    # The two kernel paths do identical math up to row tiling of the MXU ops.
    assert jnp.allclose(out_r, out_s, atol=2e-3, rtol=2e-3), "path disagreement"

    print("KERNEL_OK")
</pallas_src>

<mosaic_0001>
module attributes {stable_mosaic.version = 11 : i64} {
  func.func @kernel(%arg0: memref<16x128xf32, #tpu.memory_space<vmem>>, %arg1: memref<16x16xf32, #tpu.memory_space<vmem>>, %arg2: memref<16x16xf32, #tpu.memory_space<vmem>>, %arg3: memref<128x128xbf16, #tpu.memory_space<vmem>>, %arg4: memref<1x128xf32, #tpu.memory_space<vmem>>, %arg5: memref<128x128xbf16, #tpu.memory_space<vmem>>, %arg6: memref<1x128xf32, #tpu.memory_space<vmem>>, %arg7: memref<128x128xbf16, #tpu.memory_space<vmem>>, %arg8: memref<1x128xf32, #tpu.memory_space<vmem>>, %arg9: memref<128x128xbf16, #tpu.memory_space<vmem>>, %arg10: memref<1x128xf32, #tpu.memory_space<vmem>>, %arg11: memref<128x128xbf16, #tpu.memory_space<vmem>>, %arg12: memref<1x128xf32, #tpu.memory_space<vmem>>, %arg13: memref<128x128xbf16, #tpu.memory_space<vmem>>, %arg14: memref<1x128xf32, #tpu.memory_space<vmem>>, %arg15: memref<128x128xbf16, #tpu.memory_space<vmem>>, %arg16: memref<1x128xf32, #tpu.memory_space<vmem>>, %arg17: memref<128x128xbf16, #tpu.memory_space<vmem>>, %arg18: memref<1x128xf32, #tpu.memory_space<vmem>>, %arg19: memref<128x128xbf16, #tpu.memory_space<vmem>>, %arg20: memref<1x128xf32, #tpu.memory_space<vmem>>, %arg21: memref<128x128xbf16, #tpu.memory_space<vmem>>, %arg22: memref<1x128xf32, #tpu.memory_space<vmem>>, %arg23: memref<16x128xf32, #tpu.memory_space<vmem>>) attributes {dimension_semantics = [], scalar_prefetch = 0 : i64, scratch_operands = 0 : i64, tpu.core_type = #tpu.core_type<tc>} {
    %c0 = arith.constant 0 : index
    %c0_0 = arith.constant 0 : index
    %0 = vector.load %arg1[%c0, %c0_0] : memref<16x16xf32, #tpu.memory_space<vmem>>, vector<16x16xf32>
    %c0_1 = arith.constant 0 : index
    %c0_2 = arith.constant 0 : index
    %1 = vector.load %arg2[%c0_1, %c0_2] : memref<16x16xf32, #tpu.memory_space<vmem>>, vector<16x16xf32>
    %2 = arith.mulf %0, %1 : vector<16x16xf32>
    %3 = arith.truncf %2 : vector<16x16xf32> to vector<16x16xbf16>
    %c0_3 = arith.constant 0 : index
    %c0_4 = arith.constant 0 : index
    %4 = vector.load %arg0[%c0_3, %c0_4] : memref<16x128xf32, #tpu.memory_space<vmem>>, vector<16x128xf32>
    %5 = arith.truncf %4 : vector<16x128xf32> to vector<16x128xbf16>
    %c0_5 = arith.constant 0 : index
    %c0_6 = arith.constant 0 : index
    %6 = vector.load %arg3[%c0_5, %c0_6] : memref<128x128xbf16, #tpu.memory_space<vmem>>, vector<128x128xbf16>
    %cst = arith.constant dense<0.000000e+00> : vector<16x128xf32>
    %7 = tpu.matmul %5, %6, %cst {dimension_numbers = #tpu.dot_dimension_numbers<[1], [0], [0], [1], [0, 0, 1, 1], [], []>} : vector<16x128xbf16>, vector<128x128xbf16>, vector<16x128xf32> -> vector<16x128xf32>
    %c0_7 = arith.constant 0 : index
    %c0_8 = arith.constant 0 : index
    %8 = vector.load %arg4[%c0_7, %c0_8] : memref<1x128xf32, #tpu.memory_space<vmem>>, vector<1x128xf32>
    %9 = vector.broadcast %8 : vector<1x128xf32> to vector<16x128xf32>
    %10 = arith.addf %7, %9 : vector<16x128xf32>
    %c0_9 = arith.constant 0 : index
    %c0_10 = arith.constant 0 : index
    %11 = vector.load %arg5[%c0_9, %c0_10] : memref<128x128xbf16, #tpu.memory_space<vmem>>, vector<128x128xbf16>
    %12 = arith.truncf %10 : vector<16x128xf32> to vector<16x128xbf16>
    %cst_11 = arith.constant dense<0.000000e+00> : vector<16x128xf32>
    %13 = tpu.matmul %3, %12, %cst_11 {dimension_numbers = #tpu.dot_dimension_numbers<[1], [0], [0], [1], [0, 0, 1, 1], [], []>} : vector<16x16xbf16>, vector<16x128xbf16>, vector<16x128xf32> -> vector<16x128xf32>
    %14 = arith.truncf %13 : vector<16x128xf32> to vector<16x128xbf16>
    %cst_12 = arith.constant dense<0.000000e+00> : vector<16x128xf32>
    %15 = tpu.matmul %14, %11, %cst_12 {dimension_numbers = #tpu.dot_dimension_numbers<[1], [0], [0], [1], [0, 0, 1, 1], [], []>} : vector<16x128xbf16>, vector<128x128xbf16>, vector<16x128xf32> -> vector<16x128xf32>
    %c0_13 = arith.constant 0 : index
    %c0_14 = arith.constant 0 : index
    %16 = vector.load %arg6[%c0_13, %c0_14] : memref<1x128xf32, #tpu.memory_space<vmem>>, vector<1x128xf32>
    %17 = vector.broadcast %16 : vector<1x128xf32> to vector<16x128xf32>
    %18 = arith.addf %15, %17 : vector<16x128xf32>
    %19 = arith.truncf %18 : vector<16x128xf32> to vector<16x128xbf16>
    %c0_15 = arith.constant 0 : index
    %c0_16 = arith.constant 0 : index
    %20 = vector.load %arg7[%c0_15, %c0_16] : memref<128x128xbf16, #tpu.memory_space<vmem>>, vector<128x128xbf16>
    %cst_17 = arith.constant dense<0.000000e+00> : vector<16x128xf32>
    %21 = tpu.matmul %19, %20, %cst_17 {dimension_numbers = #tpu.dot_dimension_numbers<[1], [0], [0], [1], [0, 0, 1, 1], [], []>} : vector<16x128xbf16>, vector<128x128xbf16>, vector<16x128xf32> -> vector<16x128xf32>
    %c0_18 = arith.constant 0 : index
    %c0_19 = arith.constant 0 : index
    %22 = vector.load %arg8[%c0_18, %c0_19] : memref<1x128xf32, #tpu.memory_space<vmem>>, vector<1x128xf32>
    %23 = vector.broadcast %22 : vector<1x128xf32> to vector<16x128xf32>
    %24 = arith.addf %21, %23 : vector<16x128xf32>
    %cst_20 = arith.constant 0.000000e+00 : f32
    %25 = vector.broadcast %cst_20 : f32 to vector<16x128xf32>
    %26 = arith.cmpf ogt, %24, %25 : vector<16x128xf32>
    %cst_21 = arith.constant 2.000000e-01 : f32
    %27 = vector.broadcast %cst_21 : f32 to vector<16x128xf32>
    %28 = arith.mulf %27, %24 : vector<16x128xf32>
    %29 = arith.select %26, %24, %28 : vector<16x128xi1>, vector<16x128xf32>
    %30 = arith.truncf %29 : vector<16x128xf32> to vector<16x128xbf16>
    %c0_22 = arith.constant 0 : index
    %c0_23 = arith.constant 0 : index
    %31 = vector.load %arg9[%c0_22, %c0_23] : memref<128x128xbf16, #tpu.memory_space<vmem>>, vector<128x128xbf16>
    %cst_24 = arith.constant dense<0.000000e+00> : vector<16x128xf32>
    %32 = tpu.matmul %30, %31, %cst_24 {dimension_numbers = #tpu.dot_dimension_numbers<[1], [0], [0], [1], [0, 0, 1, 1], [], []>} : vector<16x128xbf16>, vector<128x128xbf16>, vector<16x128xf32> -> vector<16x128xf32>
    %c0_25 = arith.constant 0 : index
    %c0_26 = arith.constant 0 : index
    %33 = vector.load %arg10[%c0_25, %c0_26] : memref<1x128xf32, #tpu.memory_space<vmem>>, vector<1x128xf32>
    %34 = vector.broadcast %33 : vector<1x128xf32> to vector<16x128xf32>
    %35 = arith.addf %32, %34 : vector<16x128xf32>
    %cst_27 = arith.constant 0.000000e+00 : f32
    %36 = vector.broadcast %cst_27 : f32 to vector<16x128xf32>
    %37 = arith.cmpf ogt, %35, %36 : vector<16x128xf32>
    %cst_28 = arith.constant 2.000000e-01 : f32
    %38 = vector.broadcast %cst_28 : f32 to vector<16x128xf32>
    %39 = arith.mulf %38, %35 : vector<16x128xf32>
    %40 = arith.select %37, %35, %39 : vector<16x128xi1>, vector<16x128xf32>
    %41 = arith.truncf %40 : vector<16x128xf32> to vector<16x128xbf16>
    %c0_29 = arith.constant 0 : index
    %c0_30 = arith.constant 0 : index
    %42 = vector.load %arg11[%c0_29, %c0_30] : memref<128x128xbf16, #tpu.memory_space<vmem>>, vector<128x128xbf16>
    %cst_31 = arith.constant dense<0.000000e+00> : vector<16x128xf32>
    %43 = tpu.matmul %41, %42, %cst_31 {dimension_numbers = #tpu.dot_dimension_numbers<[1], [0], [0], [1], [0, 0, 1, 1], [], []>} : vector<16x128xbf16>, vector<128x128xbf16>, vector<16x128xf32> -> vector<16x128xf32>
    %c0_32 = arith.constant 0 : index
    %c0_33 = arith.constant 0 : index
    %44 = vector.load %arg12[%c0_32, %c0_33] : memref<1x128xf32, #tpu.memory_space<vmem>>, vector<1x128xf32>
    %45 = vector.broadcast %44 : vector<1x128xf32> to vector<16x128xf32>
    %46 = arith.addf %43, %45 : vector<16x128xf32>
    %cst_34 = arith.constant 0.000000e+00 : f32
    %47 = vector.broadcast %cst_34 : f32 to vector<16x128xf32>
    %48 = arith.cmpf ogt, %46, %47 : vector<16x128xf32>
    %cst_35 = arith.constant 2.000000e-01 : f32
    %49 = vector.broadcast %cst_35 : f32 to vector<16x128xf32>
    %50 = arith.mulf %49, %46 : vector<16x128xf32>
    %51 = arith.select %48, %46, %50 : vector<16x128xi1>, vector<16x128xf32>
    %52 = arith.truncf %51 : vector<16x128xf32> to vector<16x128xbf16>
    %c0_36 = arith.constant 0 : index
    %c0_37 = arith.constant 0 : index
    %53 = vector.load %arg13[%c0_36, %c0_37] : memref<128x128xbf16, #tpu.memory_space<vmem>>, vector<128x128xbf16>
    %cst_38 = arith.constant dense<0.000000e+00> : vector<16x128xf32>
    %54 = tpu.matmul %52, %53, %cst_38 {dimension_numbers = #tpu.dot_dimension_numbers<[1], [0], [0], [1], [0, 0, 1, 1], [], []>} : vector<16x128xbf16>, vector<128x128xbf16>, vector<16x128xf32> -> vector<16x128xf32>
    %c0_39 = arith.constant 0 : index
    %c0_40 = arith.constant 0 : index
    %55 = vector.load %arg14[%c0_39, %c0_40] : memref<1x128xf32, #tpu.memory_space<vmem>>, vector<1x128xf32>
    %56 = vector.broadcast %55 : vector<1x128xf32> to vector<16x128xf32>
    %57 = arith.addf %54, %56 : vector<16x128xf32>
    %cst_41 = arith.constant 0.000000e+00 : f32
    %58 = vector.broadcast %cst_41 : f32 to vector<16x128xf32>
    %59 = arith.maximumf %57, %58 : vector<16x128xf32>
    %c0_42 = arith.constant 0 : index
    %c0_43 = arith.constant 0 : index
    %60 = vector.load %arg15[%c0_42, %c0_43] : memref<128x128xbf16, #tpu.memory_space<vmem>>, vector<128x128xbf16>
    %61 = arith.truncf %59 : vector<16x128xf32> to vector<16x128xbf16>
    %cst_44 = arith.constant dense<0.000000e+00> : vector<16x128xf32>
    %62 = tpu.matmul %3, %61, %cst_44 {dimension_numbers = #tpu.dot_dimension_numbers<[1], [0], [0], [1], [0, 0, 1, 1], [], []>} : vector<16x16xbf16>, vector<16x128xbf16>, vector<16x128xf32> -> vector<16x128xf32>
    %63 = arith.truncf %62 : vector<16x128xf32> to vector<16x128xbf16>
    %cst_45 = arith.constant dense<0.000000e+00> : vector<16x128xf32>
    %64 = tpu.matmul %63, %60, %cst_45 {dimension_numbers = #tpu.dot_dimension_numbers<[1], [0], [0], [1], [0, 0, 1, 1], [], []>} : vector<16x128xbf16>, vector<128x128xbf16>, vector<16x128xf32> -> vector<16x128xf32>
    %c0_46 = arith.constant 0 : index
    %c0_47 = arith.constant 0 : index
    %65 = vector.load %arg16[%c0_46, %c0_47] : memref<1x128xf32, #tpu.memory_space<vmem>>, vector<1x128xf32>
    %66 = vector.broadcast %65 : vector<1x128xf32> to vector<16x128xf32>
    %67 = arith.addf %64, %66 : vector<16x128xf32>
    %68 = arith.addf %67, %59 : vector<16x128xf32>
    %cst_48 = arith.constant 0.000000e+00 : f32
    %69 = vector.broadcast %cst_48 : f32 to vector<16x128xf32>
    %70 = arith.maximumf %68, %69 : vector<16x128xf32>
    %71 = arith.truncf %70 : vector<16x128xf32> to vector<16x128xbf16>
    %c0_49 = arith.constant 0 : index
    %c0_50 = arith.constant 0 : index
    %72 = vector.load %arg17[%c0_49, %c0_50] : memref<128x128xbf16, #tpu.memory_space<vmem>>, vector<128x128xbf16>
    %cst_51 = arith.constant dense<0.000000e+00> : vector<16x128xf32>
    %73 = tpu.matmul %71, %72, %cst_51 {dimension_numbers = #tpu.dot_dimension_numbers<[1], [0], [0], [1], [0, 0, 1, 1], [], []>} : vector<16x128xbf16>, vector<128x128xbf16>, vector<16x128xf32> -> vector<16x128xf32>
    %c0_52 = arith.constant 0 : index
    %c0_53 = arith.constant 0 : index
    %74 = vector.load %arg18[%c0_52, %c0_53] : memref<1x128xf32, #tpu.memory_space<vmem>>, vector<1x128xf32>
    %75 = vector.broadcast %74 : vector<1x128xf32> to vector<16x128xf32>
    %76 = arith.addf %73, %75 : vector<16x128xf32>
    %c0_54 = arith.constant 0 : index
    %c0_55 = arith.constant 0 : index
    %77 = vector.load %arg19[%c0_54, %c0_55] : memref<128x128xbf16, #tpu.memory_space<vmem>>, vector<128x128xbf16>
    %78 = arith.truncf %76 : vector<16x128xf32> to vector<16x128xbf16>
    %cst_56 = arith.constant dense<0.000000e+00> : vector<16x128xf32>
    %79 = tpu.matmul %3, %78, %cst_56 {dimension_numbers = #tpu.dot_dimension_numbers<[1], [0], [0], [1], [0, 0, 1, 1], [], []>} : vector<16x16xbf16>, vector<16x128xbf16>, vector<16x128xf32> -> vector<16x128xf32>
    %80 = arith.truncf %79 : vector<16x128xf32> to vector<16x128xbf16>
    %cst_57 = arith.constant dense<0.000000e+00> : vector<16x128xf32>
    %81 = tpu.matmul %80, %77, %cst_57 {dimension_numbers = #tpu.dot_dimension_numbers<[1], [0], [0], [1], [0, 0, 1, 1], [], []>} : vector<16x128xbf16>, vector<128x128xbf16>, vector<16x128xf32> -> vector<16x128xf32>
    %c0_58 = arith.constant 0 : index
    %c0_59 = arith.constant 0 : index
    %82 = vector.load %arg20[%c0_58, %c0_59] : memref<1x128xf32, #tpu.memory_space<vmem>>, vector<1x128xf32>
    %83 = vector.broadcast %82 : vector<1x128xf32> to vector<16x128xf32>
    %84 = arith.addf %81, %83 : vector<16x128xf32>
    %85 = arith.truncf %84 : vector<16x128xf32> to vector<16x128xbf16>
    %c0_60 = arith.constant 0 : index
    %c0_61 = arith.constant 0 : index
    %86 = vector.load %arg21[%c0_60, %c0_61] : memref<128x128xbf16, #tpu.memory_space<vmem>>, vector<128x128xbf16>
    %cst_62 = arith.constant dense<0.000000e+00> : vector<16x128xf32>
    %87 = tpu.matmul %85, %86, %cst_62 {dimension_numbers = #tpu.dot_dimension_numbers<[1], [0], [0], [1], [0, 0, 1, 1], [], []>} : vector<16x128xbf16>, vector<128x128xbf16>, vector<16x128xf32> -> vector<16x128xf32>
    %c0_63 = arith.constant 0 : index
    %c0_64 = arith.constant 0 : index
    %88 = vector.load %arg22[%c0_63, %c0_64] : memref<1x128xf32, #tpu.memory_space<vmem>>, vector<1x128xf32>
    %89 = vector.broadcast %88 : vector<1x128xf32> to vector<16x128xf32>
    %90 = arith.addf %87, %89 : vector<16x128xf32>
    %c0_65 = arith.constant 0 : index
    %c0_66 = arith.constant 0 : index
    %91 = vector.load %arg23[%c0_65, %c0_66] : memref<16x128xf32, #tpu.memory_space<vmem>>, vector<16x128xf32>
    tpu.vector_store %arg23[%c0_65, %c0_66], %90 {strides = array<i32>} : memref<16x128xf32, #tpu.memory_space<vmem>>, vector<16x128xf32>,
    return
  }
}

</mosaic_0001>

<llo_original>
// kernel: gcn_d_forward.1
$region0: #{gcn_d_forward.1}
  #allocation0 [shape = 'u32[]', space=smem, size = 0x4, offset = 0x4, fixed_abs, tag = 'smem constant byte address 0x4 - core index']
  #allocation1 [shape = 'u32[144,128]{1,0:T(1,128)}', space=vmem, size = 0x12000, scoped, tag = 'internal scratch']
  %s0 = inlined_call_operand.vmem [shape: f32[16,128], index: 0, kind: input, shape index: {}]
  %s1 = inlined_call_operand.vmem [shape: f32[16,16], index: 1, kind: input, shape index: {}]
  %s2 = inlined_call_operand.vmem [shape: f32[16,16], index: 2, kind: input, shape index: {}]
  %s3 = inlined_call_operand.vmem [shape: bf16[128,128], index: 3, kind: input, shape index: {}]
  %s4 = inlined_call_operand.vmem [shape: f32[1,128], index: 4, kind: input, shape index: {}]
  %s5 = inlined_call_operand.vmem [shape: bf16[128,128], index: 5, kind: input, shape index: {}]
  %s6 = inlined_call_operand.vmem [shape: f32[1,128], index: 6, kind: input, shape index: {}]
  %s7 = inlined_call_operand.vmem [shape: bf16[128,128], index: 7, kind: input, shape index: {}]
  %s8 = inlined_call_operand.vmem [shape: f32[1,128], index: 8, kind: input, shape index: {}]
  %s9 = inlined_call_operand.vmem [shape: bf16[128,128], index: 9, kind: input, shape index: {}]
  %s10 = inlined_call_operand.vmem [shape: f32[1,128], index: 10, kind: input, shape index: {}]
  %s11 = inlined_call_operand.vmem [shape: bf16[128,128], index: 11, kind: input, shape index: {}]
  %s12 = inlined_call_operand.vmem [shape: f32[1,128], index: 12, kind: input, shape index: {}]
  %s13 = inlined_call_operand.vmem [shape: bf16[128,128], index: 13, kind: input, shape index: {}]
  %s14 = inlined_call_operand.vmem [shape: f32[1,128], index: 14, kind: input, shape index: {}]
  %s15 = inlined_call_operand.vmem [shape: bf16[128,128], index: 15, kind: input, shape index: {}]
  %s16 = inlined_call_operand.vmem [shape: f32[1,128], index: 16, kind: input, shape index: {}]
  %s17 = inlined_call_operand.vmem [shape: bf16[128,128], index: 17, kind: input, shape index: {}]
  %s18 = inlined_call_operand.vmem [shape: f32[1,128], index: 18, kind: input, shape index: {}]
  %s19 = inlined_call_operand.vmem [shape: bf16[128,128], index: 19, kind: input, shape index: {}]
  %s20 = inlined_call_operand.vmem [shape: f32[1,128], index: 20, kind: input, shape index: {}]
  %s21 = inlined_call_operand.vmem [shape: bf16[128,128], index: 21, kind: input, shape index: {}]
  %s22 = inlined_call_operand.vmem [shape: f32[1,128], index: 22, kind: input, shape index: {}]
  %s23 = inlined_call_operand.vmem [shape: f32[16,128], index: 23, kind: output, shape index: {}]
  %s24 = sld [smem:[#allocation0]]
  $region102: #{gcn_d_forward.1} parent=0
    _
  %s26 = ssub.s32 1, %s24
  %s27 = scalar_select 0, %s26, %s24
  // Predicated region
  $region2: #{gcn_d_forward.1} parent=0 // pred_check
    _
  $region3: #{gcn_d_forward.1} parent=0 // pred_check_branch
    %29 = sbr.rel (0) target = $region5
  $region4: #{gcn_d_forward.1} parent=0 // pred_region
    _
  $region5: #{gcn_d_forward.1} parent=0 // pred_fallthru
    _
  // Predicated region
  $region6: #{gcn_d_forward.1} parent=0 // pred_check
    _
  $region7: #{gcn_d_forward.1} parent=0 // pred_check_branch
    %31 = sbr.rel (0) target = $region9
  $region8: #{gcn_d_forward.1} parent=0 // pred_region
    _
  $region9: #{gcn_d_forward.1} parent=0 // pred_fallthru
    _
  // Predicated region
  $region10: #{gcn_d_forward.1} parent=0 // pred_check
    _
  $region11: #{gcn_d_forward.1} parent=0 // pred_check_branch
    %33 = sbr.rel (0) target = $region13
  $region12: #{gcn_d_forward.1} parent=0 // pred_region
    _
  $region13: #{gcn_d_forward.1} parent=0 // pred_fallthru
    _
  // Predicated region
  $region14: #{gcn_d_forward.1} parent=0 // pred_check
    _
  $region15: #{gcn_d_forward.1} parent=0 // pred_check_branch
    %35 = sbr.rel (0) target = $region17
  $region16: #{gcn_d_forward.1} parent=0 // pred_region
    _
  $region17: #{gcn_d_forward.1} parent=0 // pred_fallthru
    _
  // Predicated region
  $region18: #{gcn_d_forward.1} parent=0 // pred_check
    _
  $region19: #{gcn_d_forward.1} parent=0 // pred_check_branch
    %37 = sbr.rel (0) target = $region21
  $region20: #{gcn_d_forward.1} parent=0 // pred_region
    _
  $region21: #{gcn_d_forward.1} parent=0 // pred_fallthru
    _
  // Predicated region
  $region22: #{gcn_d_forward.1} parent=0 // pred_check
    _
  $region23: #{gcn_d_forward.1} parent=0 // pred_check_branch
    %39 = sbr.rel (0) target = $region25
  $region24: #{gcn_d_forward.1} parent=0 // pred_region
    _
  $region25: #{gcn_d_forward.1} parent=0 // pred_fallthru
    _
  // Predicated region
  $region26: #{gcn_d_forward.1} parent=0 // pred_check
    _
  $region27: #{gcn_d_forward.1} parent=0 // pred_check_branch
    %41 = sbr.rel (0) target = $region29
  $region28: #{gcn_d_forward.1} parent=0 // pred_region
    _
  $region29: #{gcn_d_forward.1} parent=0 // pred_fallthru
    _
  // Predicated region
  $region30: #{gcn_d_forward.1} parent=0 // pred_check
    _
  $region31: #{gcn_d_forward.1} parent=0 // pred_check_branch
    %43 = sbr.rel (0) target = $region33
  $region32: #{gcn_d_forward.1} parent=0 // pred_region
    _
  $region33: #{gcn_d_forward.1} parent=0 // pred_fallthru
    _
  // Predicated region
  $region34: #{gcn_d_forward.1} parent=0 // pred_check
    _
  $region35: #{gcn_d_forward.1} parent=0 // pred_check_branch
    %45 = sbr.rel (0) target = $region37
  $region36: #{gcn_d_forward.1} parent=0 // pred_region
    _
  $region37: #{gcn_d_forward.1} parent=0 // pred_fallthru
    _
  // Predicated region
  $region38: #{gcn_d_forward.1} parent=0 // pred_check
    _
  $region39: #{gcn_d_forward.1} parent=0 // pred_check_branch
    %47 = sbr.rel (0) target = $region41
  $region40: #{gcn_d_forward.1} parent=0 // pred_region
    _
  $region41: #{gcn_d_forward.1} parent=0 // pred_fallthru
    _
  // Predicated region
  $region42: #{gcn_d_forward.1} parent=0 // pred_check
    _
  $region43: #{gcn_d_forward.1} parent=0 // pred_check_branch
    %49 = sbr.rel (0) target = $region45
  $region44: #{gcn_d_forward.1} parent=0 // pred_region
    _
  $region45: #{gcn_d_forward.1} parent=0 // pred_fallthru
    _
  // Predicated region
  $region46: #{gcn_d_forward.1} parent=0 // pred_check
    _
  $region47: #{gcn_d_forward.1} parent=0 // pred_check_branch
    %51 = sbr.rel (0) target = $region49
  $region48: #{gcn_d_forward.1} parent=0 // pred_region
    _
  $region49: #{gcn_d_forward.1} parent=0 // pred_fallthru
    _
  // Predicated region
  $region50: #{gcn_d_forward.1} parent=0 // pred_check
    _
  $region51: #{gcn_d_forward.1} parent=0 // pred_check_branch
    %53 = sbr.rel (0) target = $region53
  $region52: #{gcn_d_forward.1} parent=0 // pred_region
    _
  $region53: #{gcn_d_forward.1} parent=0 // pred_fallthru
    _
  // Predicated region
  $region54: #{gcn_d_forward.1} parent=0 // pred_check
    _
  $region55: #{gcn_d_forward.1} parent=0 // pred_check_branch
    %55 = sbr.rel (0) target = $region57
  $region56: #{gcn_d_forward.1} parent=0 // pred_region
    _
  $region57: #{gcn_d_forward.1} parent=0 // pred_fallthru
    _
  // Predicated region
  $region58: #{gcn_d_forward.1} parent=0 // pred_check
    _
  $region59: #{gcn_d_forward.1} parent=0 // pred_check_branch
    %57 = sbr.rel (0) target = $region61
  $region60: #{gcn_d_forward.1} parent=0 // pred_region
    _
  $region61: #{gcn_d_forward.1} parent=0 // pred_fallthru
    _
  // Predicated region
  $region62: #{gcn_d_forward.1} parent=0 // pred_check
    _
  $region63: #{gcn_d_forward.1} parent=0 // pred_check_branch
    %59 = sbr.rel (0) target = $region65
  $region64: #{gcn_d_forward.1} parent=0 // pred_region
    _
  $region65: #{gcn_d_forward.1} parent=0 // pred_fallthru
    _
  // Predicated region
  $region66: #{gcn_d_forward.1} parent=0 // pred_check
    _
  $region67: #{gcn_d_forward.1} parent=0 // pred_check_branch
    %61 = sbr.rel (0) target = $region69
  $region68: #{gcn_d_forward.1} parent=0 // pred_region
    _
  $region69: #{gcn_d_forward.1} parent=0 // pred_fallthru
    _
  // Predicated region
  $region70: #{gcn_d_forward.1} parent=0 // pred_check
    _
  $region71: #{gcn_d_forward.1} parent=0 // pred_check_branch
    %63 = sbr.rel (0) target = $region73
  $region72: #{gcn_d_forward.1} parent=0 // pred_region
    _
  $region73: #{gcn_d_forward.1} parent=0 // pred_fallthru
    _
  // Predicated region
  $region74: #{gcn_d_forward.1} parent=0 // pred_check
    _
  $region75: #{gcn_d_forward.1} parent=0 // pred_check_branch
    %65 = sbr.rel (0) target = $region77
  $region76: #{gcn_d_forward.1} parent=0 // pred_region
    _
  $region77: #{gcn_d_forward.1} parent=0 // pred_fallthru
    _
  // Predicated region
  $region78: #{gcn_d_forward.1} parent=0 // pred_check
    _
  $region79: #{gcn_d_forward.1} parent=0 // pred_check_branch
    %67 = sbr.rel (0) target = $region81
  $region80: #{gcn_d_forward.1} parent=0 // pred_region
    _
  $region81: #{gcn_d_forward.1} parent=0 // pred_fallthru
    _
  // Predicated region
  $region82: #{gcn_d_forward.1} parent=0 // pred_check
    _
  $region83: #{gcn_d_forward.1} parent=0 // pred_check_branch
    %69 = sbr.rel (0) target = $region85
  $region84: #{gcn_d_forward.1} parent=0 // pred_region
    _
  $region85: #{gcn_d_forward.1} parent=0 // pred_fallthru
    _
  // Predicated region
  $region86: #{gcn_d_forward.1} parent=0 // pred_check
    _
  $region87: #{gcn_d_forward.1} parent=0 // pred_check_branch
    %71 = sbr.rel (0) target = $region89
  $region88: #{gcn_d_forward.1} parent=0 // pred_region
    _
  $region89: #{gcn_d_forward.1} parent=0 // pred_fallthru
    _
  // Predicated region
  $region90: #{gcn_d_forward.1} parent=0 // pred_check
    _
  $region91: #{gcn_d_forward.1} parent=0 // pred_check_branch
    %73 = sbr.rel (0) target = $region93
  $region92: #{gcn_d_forward.1} parent=0 // pred_region
    _
  $region93: #{gcn_d_forward.1} parent=0 // pred_fallthru
    _
  %v75 = vld [vmem:[%s1] sm:$0xff]
  %v76 = vld [vmem:[%s1 + $0x8] sm:$0xff]
  %v77 = vld [vmem:[%s2] sm:$0xff]
  %v78 = vld [vmem:[%s2 + $0x8] sm:$0xff]
  %v79 = vmul.f32 %v75, %v77
  %v80 = vmul.f32 %v76, %v78
  %v81 = vpack.c.bf16 %v80, %v79
  %v82 = vld [vmem:[%s0] sm:$0xff]
  %v83 = vld [vmem:[%s0 + $0x8] sm:$0xff]
  %v84 = vpack.c.bf16 %v83, %v82
  %v85 = vld [vmem:[%s3] sm:$0xf]
  %v86 = vld [vmem:[%s3 + $0x4] sm:$0xf]
  %v87 = vld [vmem:[%s3 + $0x8] sm:$0xf]
  %v88 = vld [vmem:[%s3 + $0xc] sm:$0xf]
  %v89 = vld [vmem:[%s3 + $0x10] sm:$0xf]
  %v90 = vld [vmem:[%s3 + $0x14] sm:$0xf]
  %v91 = vld [vmem:[%s3 + $0x18] sm:$0xf]
  %v92 = vld [vmem:[%s3 + $0x1c] sm:$0xf]
  %v93 = vld [vmem:[%s3 + $0x20] sm:$0xf]
  %v94 = vld [vmem:[%s3 + $0x24] sm:$0xf]
  %v95 = vld [vmem:[%s3 + $0x28] sm:$0xf]
  %v96 = vld [vmem:[%s3 + $0x2c] sm:$0xf]
  %v97 = vld [vmem:[%s3 + $0x30] sm:$0xf]
  %v98 = vld [vmem:[%s3 + $0x34] sm:$0xf]
  %v99 = vld [vmem:[%s3 + $0x38] sm:$0xf]
  %v100 = vld [vmem:[%s3 + $0x3c] sm:$0xf]
  %v101 = vld [vmem:[%s4] sm:$0x1]
  %v103 = vlaneseq
  %v104 = vshrl.u32 %v103, 7
  %v105 = vsub.s32 0, %v104
  %v106 = vrot.slane %v101, %v105
  %v124 = vunpack.c.l.b16 %v85
  %v125 = vunpack.c.l.b16 %v86
  %v126 = vunpack.c.l.b16 %v87
  %v127 = vunpack.c.l.b16 %v88
  %v128 = vunpack.c.l.b16 %v89
  %v129 = vunpack.c.l.b16 %v90
  %v130 = vunpack.c.l.b16 %v91
  %v131 = vunpack.c.l.b16 %v92
  %v132 = vunpack.c.l.b16 %v93
  %v133 = vunpack.c.l.b16 %v94
  %v134 = vunpack.c.l.b16 %v95
  %v135 = vunpack.c.l.b16 %v96
  %v136 = vunpack.c.l.b16 %v97
  %v137 = vunpack.c.l.b16 %v98
  %v138 = vunpack.c.l.b16 %v99
  %v139 = vunpack.c.l.b16 %v100
  %v140 = vpack.c.b16 %v125, %v124
  %v141 = vpack.c.b16 %v127, %v126
  %v142 = vpack.c.b16 %v129, %v128
  %v143 = vpack.c.b16 %v131, %v130
  %v144 = vpack.c.b16 %v133, %v132
  %v145 = vpack.c.b16 %v135, %v134
  %v146 = vpack.c.b16 %v137, %v136
  %v147 = vpack.c.b16 %v139, %v138
  %156 = vmatprep.subr.bf16.mxu0 0
  %157 = vmatpush1.bf16.msra.mxu0 %v147
  %158 = vmatprep.subr.bf16.mxu0 0
  %159 = vmatpush1.bf16.msra.mxu0 %v146
  %160 = vmatprep.subr.bf16.mxu0 0
  %161 = vmatpush1.bf16.msra.mxu0 %v145
  %162 = vmatprep.subr.bf16.mxu0 0
  %163 = vmatpush1.bf16.msra.mxu0 %v144
  %164 = vmatprep.subr.bf16.mxu0 0
  %165 = vmatpush1.bf16.msra.mxu0 %v143
  %166 = vmatprep.subr.bf16.mxu0 0
  %167 = vmatpush1.bf16.msra.mxu0 %v142
  %168 = vmatprep.subr.bf16.mxu0 0
  %169 = vmatpush1.bf16.msra.mxu0 %v141
  %170 = vmatprep.subr.bf16.mxu0 0
  %171 = vmatpush1.bf16.msra.mxu0 %v140
  %172 = vmatprep.subr.bf16.mxu0 0
  %173 = vmatpush2.bf16.msra.mxu0 0
  %174 = vmatprep.subr.bf16.mxu0 0
  %175 = vmatpush2.bf16.msra.mxu0 0
  %176 = vmatprep.subr.bf16.mxu0 0
  %177 = vmatpush2.bf16.msra.mxu0 0
  %178 = vmatprep.subr.bf16.mxu0 0
  %179 = vmatpush2.bf16.msra.mxu0 0
  %180 = vmatprep.subr.bf16.mxu0 0
  %181 = vmatpush2.bf16.msra.mxu0 0
  %182 = vmatprep.subr.bf16.mxu0 0
  %183 = vmatpush2.bf16.msra.mxu0 0
  %184 = vmatprep.subr.bf16.mxu0 0
  %185 = vmatpush2.bf16.msra.mxu0 0
  %186 = vmatprep.subr.bf16.mxu0 0
  %187 = vmatpush2.bf16.msra.mxu0 0
  %188 = vmatprep.mubr.bf16.mxu0 0
  %189 = vmatmul.mubr.bf16.gmra.mxu0 %v84
  %v190 = vpop.f32.mrf.mxu0
  %v191 = vadd.f32 %v106, %v190
  %v192 = vpop.f32.mrf.mxu0
  %v193 = vpop.f32.mrf.mxu0
  %v194 = vadd.f32 %v106, %v193
  %v195 = vpop.f32.mrf.mxu0
  %196 = vdwg.mxu0
  %v197 = vld [vmem:[%s5] sm:$0xf]
  %v198 = vld [vmem:[%s5 + $0x4] sm:$0xf]
  %v199 = vld [vmem:[%s5 + $0x8] sm:$0xf]
  %v200 = vld [vmem:[%s5 + $0xc] sm:$0xf]
  %v201 = vld [vmem:[%s5 + $0x10] sm:$0xf]
  %v202 = vld [vmem:[%s5 + $0x14] sm:$0xf]
  %v203 = vld [vmem:[%s5 + $0x18] sm:$0xf]
  %v204 = vld [vmem:[%s5 + $0x1c] sm:$0xf]
  %v205 = vld [vmem:[%s5 + $0x20] sm:$0xf]
  %v206 = vld [vmem:[%s5 + $0x24] sm:$0xf]
  %v207 = vld [vmem:[%s5 + $0x28] sm:$0xf]
  %v208 = vld [vmem:[%s5 + $0x2c] sm:$0xf]
  %v209 = vld [vmem:[%s5 + $0x30] sm:$0xf]
  %v210 = vld [vmem:[%s5 + $0x34] sm:$0xf]
  %v211 = vld [vmem:[%s5 + $0x38] sm:$0xf]
  %v212 = vld [vmem:[%s5 + $0x3c] sm:$0xf]
  %v213 = vpack.c.bf16 %v194, %v191
  %vm214 = vcmask 130048
  %v216 = vsel %vm214, %v81, 0
  %218 = vmatprep.subr.bf16.mxu0 0
  %219 = vmatpush1.bf16.msra.mxu0 0
  %220 = vmatprep.subr.bf16.mxu0 0
  %221 = vmatpush1.bf16.msra.mxu0 0
  %222 = vmatprep.subr.bf16.mxu0 0
  %223 = vmatpush1.bf16.msra.mxu0 0
  %224 = vmatprep.subr.bf16.mxu0 0
  %225 = vmatpush1.bf16.msra.mxu0 0
  %226 = vmatprep.subr.bf16.mxu0 0
  %227 = vmatpush1.bf16.msra.mxu0 0
  %228 = vmatprep.subr.bf16.mxu0 0
  %229 = vmatpush1.bf16.msra.mxu0 0
  %230 = vmatprep.subr.bf16.mxu0 0
  %231 = vmatpush1.bf16.msra.mxu0 0
  %232 = vmatprep.subr.bf16.mxu0 0
  %233 = vmatpush1.bf16.msra.mxu0 %v213
  %234 = vmatprep.subr.bf16.mxu0 0
  %235 = vmatpush2.bf16.msra.mxu0 0
  %236 = vmatprep.subr.bf16.mxu0 0
  %237 = vmatpush2.bf16.msra.mxu0 0
  %238 = vmatprep.subr.bf16.mxu0 0
  %239 = vmatpush2.bf16.msra.mxu0 0
  %240 = vmatprep.subr.bf16.mxu0 0
  %241 = vmatpush2.bf16.msra.mxu0 0
  %242 = vmatprep.subr.bf16.mxu0 0
  %243 = vmatpush2.bf16.msra.mxu0 0
  %244 = vmatprep.subr.bf16.mxu0 0
  %245 = vmatpush2.bf16.msra.mxu0 0
  %246 = vmatprep.subr.bf16.mxu0 0
  %247 = vmatpush2.bf16.msra.mxu0 0
  %248 = vmatprep.subr.bf16.mxu0 0
  %249 = vmatpush2.bf16.msra.mxu0 0
  %250 = vmatprep.mubr.bf16.mxu0 0
  %251 = vmatmul.mubr.bf16.gmra.mxu0 %v216
  %v252 = vpop.f32.mrf.mxu0
  %v253 = vadd.f32 0.0, %v252
  %v254 = vpop.f32.mrf.mxu0
  %v255 = vpop.f32.mrf.mxu0
  %v256 = vadd.f32 0.0, %v255
  %v257 = vpop.f32.mrf.mxu0
  %258 = vdwg.mxu0
  %v259 = vpack.c.bf16 %v256, %v253
  %v260 = vld [vmem:[%s6] sm:$0x1]
  %v262 = vlaneseq
  %v263 = vshrl.u32 %v262, 7
  %v264 = vsub.s32 0, %v263
  %v265 = vrot.slane %v260, %v264
  %v283 = vunpack.c.l.b16 %v197
  %v284 = vunpack.c.l.b16 %v198
  %v285 = vunpack.c.l.b16 %v199
  %v286 = vunpack.c.l.b16 %v200
  %v287 = vunpack.c.l.b16 %v201
  %v288 = vunpack.c.l.b16 %v202
  %v289 = vunpack.c.l.b16 %v203
  %v290 = vunpack.c.l.b16 %v204
  %v291 = vunpack.c.l.b16 %v205
  %v292 = vunpack.c.l.b16 %v206
  %v293 = vunpack.c.l.b16 %v207
  %v294 = vunpack.c.l.b16 %v208
  %v295 = vunpack.c.l.b16 %v209
  %v296 = vunpack.c.l.b16 %v210
  %v297 = vunpack.c.l.b16 %v211
  %v298 = vunpack.c.l.b16 %v212
  %v299 = vpack.c.b16 %v284, %v283
  %v300 = vpack.c.b16 %v286, %v285
  %v301 = vpack.c.b16 %v288, %v287
  %v302 = vpack.c.b16 %v290, %v289
  %v303 = vpack.c.b16 %v292, %v291
  %v304 = vpack.c.b16 %v294, %v293
  %v305 = vpack.c.b16 %v296, %v295
  %v306 = vpack.c.b16 %v298, %v297
  %315 = vmatprep.subr.bf16.mxu0 0
  %316 = vmatpush1.bf16.msra.mxu0 %v306
  %317 = vmatprep.subr.bf16.mxu0 0
  %318 = vmatpush1.bf16.msra.mxu0 %v305
  %319 = vmatprep.subr.bf16.mxu0 0
  %320 = vmatpush1.bf16.msra.mxu0 %v304
  %321 = vmatprep.subr.bf16.mxu0 0
  %322 = vmatpush1.bf16.msra.mxu0 %v303
  %323 = vmatprep.subr.bf16.mxu0 0
  %324 = vmatpush1.bf16.msra.mxu0 %v302
  %325 = vmatprep.subr.bf16.mxu0 0
  %326 = vmatpush1.bf16.msra.mxu0 %v301
  %327 = vmatprep.subr.bf16.mxu0 0
  %328 = vmatpush1.bf16.msra.mxu0 %v300
  %329 = vmatprep.subr.bf16.mxu0 0
  %330 = vmatpush1.bf16.msra.mxu0 %v299
  %331 = vmatprep.subr.bf16.mxu0 0
  %332 = vmatpush2.bf16.msra.mxu0 0
  %333 = vmatprep.subr.bf16.mxu0 0
  %334 = vmatpush2.bf16.msra.mxu0 0
  %335 = vmatprep.subr.bf16.mxu0 0
  %336 = vmatpush2.bf16.msra.mxu0 0
  %337 = vmatprep.subr.bf16.mxu0 0
  %338 = vmatpush2.bf16.msra.mxu0 0
  %339 = vmatprep.subr.bf16.mxu0 0
  %340 = vmatpush2.bf16.msra.mxu0 0
  %341 = vmatprep.subr.bf16.mxu0 0
  %342 = vmatpush2.bf16.msra.mxu0 0
  %343 = vmatprep.subr.bf16.mxu0 0
  %344 = vmatpush2.bf16.msra.mxu0 0
  %345 = vmatprep.subr.bf16.mxu0 0
  %346 = vmatpush2.bf16.msra.mxu0 0
  %347 = vmatprep.mubr.bf16.mxu0 0
  %348 = vmatmul.mubr.bf16.gmra.mxu0 %v259
  %v349 = vpop.f32.mrf.mxu0
  %v350 = vadd.f32 %v265, %v349
  %v351 = vpop.f32.mrf.mxu0
  %v352 = vpop.f32.mrf.mxu0
  %v353 = vadd.f32 %v265, %v352
  %v354 = vpop.f32.mrf.mxu0
  %355 = vdwg.mxu0
  %v356 = vpack.c.bf16 %v353, %v350
  %v357 = vld [vmem:[%s7] sm:$0xf]
  %v358 = vld [vmem:[%s7 + $0x4] sm:$0xf]
  %v359 = vld [vmem:[%s7 + $0x8] sm:$0xf]
  %v360 = vld [vmem:[%s7 + $0xc] sm:$0xf]
  %v361 = vld [vmem:[%s7 + $0x10] sm:$0xf]
  %v362 = vld [vmem:[%s7 + $0x14] sm:$0xf]
  %v363 = vld [vmem:[%s7 + $0x18] sm:$0xf]
  %v364 = vld [vmem:[%s7 + $0x1c] sm:$0xf]
  %v365 = vld [vmem:[%s7 + $0x20] sm:$0xf]
  %v366 = vld [vmem:[%s7 + $0x24] sm:$0xf]
  %v367 = vld [vmem:[%s7 + $0x28] sm:$0xf]
  %v368 = vld [vmem:[%s7 + $0x2c] sm:$0xf]
  %v369 = vld [vmem:[%s7 + $0x30] sm:$0xf]
  %v370 = vld [vmem:[%s7 + $0x34] sm:$0xf]
  %v371 = vld [vmem:[%s7 + $0x38] sm:$0xf]
  %v372 = vld [vmem:[%s7 + $0x3c] sm:$0xf]
  %v373 = vld [vmem:[%s8] sm:$0x1]
  %v375 = vlaneseq
  %v376 = vshrl.u32 %v375, 7
  %v377 = vsub.s32 0, %v376
  %v378 = vrot.slane %v373, %v377
  %v396 = vunpack.c.l.b16 %v357
  %v397 = vunpack.c.l.b16 %v358
  %v398 = vunpack.c.l.b16 %v359
  %v399 = vunpack.c.l.b16 %v360
  %v400 = vunpack.c.l.b16 %v361
  %v401 = vunpack.c.l.b16 %v362
  %v402 = vunpack.c.l.b16 %v363
  %v403 = vunpack.c.l.b16 %v364
  %v404 = vunpack.c.l.b16 %v365
  %v405 = vunpack.c.l.b16 %v366
  %v406 = vunpack.c.l.b16 %v367
  %v407 = vunpack.c.l.b16 %v368
  %v408 = vunpack.c.l.b16 %v369
  %v409 = vunpack.c.l.b16 %v370
  %v410 = vunpack.c.l.b16 %v371
  %v411 = vunpack.c.l.b16 %v372
  %v412 = vpack.c.b16 %v397, %v396
  %v413 = vpack.c.b16 %v399, %v398
  %v414 = vpack.c.b16 %v401, %v400
  %v415 = vpack.c.b16 %v403, %v402
  %v416 = vpack.c.b16 %v405, %v404
  %v417 = vpack.c.b16 %v407, %v406
  %v418 = vpack.c.b16 %v409, %v408
  %v419 = vpack.c.b16 %v411, %v410
  %428 = vmatprep.subr.bf16.mxu0 0
  %429 = vmatpush1.bf16.msra.mxu0 %v419
  %430 = vmatprep.subr.bf16.mxu0 0
  %431 = vmatpush1.bf16.msra.mxu0 %v418
  %432 = vmatprep.subr.bf16.mxu0 0
  %433 = vmatpush1.bf16.msra.mxu0 %v417
  %434 = vmatprep.subr.bf16.mxu0 0
  %435 = vmatpush1.bf16.msra.mxu0 %v416
  %436 = vmatprep.subr.bf16.mxu0 0
  %437 = vmatpush1.bf16.msra.mxu0 %v415
  %438 = vmatprep.subr.bf16.mxu0 0
  %439 = vmatpush1.bf16.msra.mxu0 %v414
  %440 = vmatprep.subr.bf16.mxu0 0
  %441 = vmatpush1.bf16.msra.mxu0 %v413
  %442 = vmatprep.subr.bf16.mxu0 0
  %443 = vmatpush1.bf16.msra.mxu0 %v412
  %444 = vmatprep.subr.bf16.mxu0 0
  %445 = vmatpush2.bf16.msra.mxu0 0
  %446 = vmatprep.subr.bf16.mxu0 0
  %447 = vmatpush2.bf16.msra.mxu0 0
  %448 = vmatprep.subr.bf16.mxu0 0
  %449 = vmatpush2.bf16.msra.mxu0 0
  %450 = vmatprep.subr.bf16.mxu0 0
  %451 = vmatpush2.bf16.msra.mxu0 0
  %452 = vmatprep.subr.bf16.mxu0 0
  %453 = vmatpush2.bf16.msra.mxu0 0
  %454 = vmatprep.subr.bf16.mxu0 0
  %455 = vmatpush2.bf16.msra.mxu0 0
  %456 = vmatprep.subr.bf16.mxu0 0
  %457 = vmatpush2.bf16.msra.mxu0 0
  %458 = vmatprep.subr.bf16.mxu0 0
  %459 = vmatpush2.bf16.msra.mxu0 0
  %460 = vmatprep.mubr.bf16.mxu0 0
  %461 = vmatmul.mubr.bf16.gmra.mxu0 %v356
  %v462 = vpop.f32.mrf.mxu0
  %v463 = vadd.f32 %v378, %v462
  %v464 = vpop.f32.mrf.mxu0
  %v465 = vpop.f32.mrf.mxu0
  %v466 = vadd.f32 %v378, %v465
  %v467 = vpop.f32.mrf.mxu0
  %468 = vdwg.mxu0
  %vm469 = vcmp.gt.f32.partialorder %v463, 0.0
  %vm470 = vcmp.gt.f32.partialorder %v466, 0.0
  %v471 = vmul.f32 %v463, 0.2
  %v472 = vmul.f32 %v466, 0.2
  %v473 = vsel %vm469, %v463, %v471
  %v474 = vsel %vm470, %v466, %v472
  %v475 = vpack.c.bf16 %v474, %v473
  %v476 = vld [vmem:[%s9] sm:$0xf]
  %v477 = vld [vmem:[%s9 + $0x4] sm:$0xf]
  %v478 = vld [vmem:[%s9 + $0x8] sm:$0xf]
  %v479 = vld [vmem:[%s9 + $0xc] sm:$0xf]
  %v480 = vld [vmem:[%s9 + $0x10] sm:$0xf]
  %v481 = vld [vmem:[%s9 + $0x14] sm:$0xf]
  %v482 = vld [vmem:[%s9 + $0x18] sm:$0xf]
  %v483 = vld [vmem:[%s9 + $0x1c] sm:$0xf]
  %v484 = vld [vmem:[%s9 + $0x20] sm:$0xf]
  %v485 = vld [vmem:[%s9 + $0x24] sm:$0xf]
  %v486 = vld [vmem:[%s9 + $0x28] sm:$0xf]
  %v487 = vld [vmem:[%s9 + $0x2c] sm:$0xf]
  %v488 = vld [vmem:[%s9 + $0x30] sm:$0xf]
  %v489 = vld [vmem:[%s9 + $0x34] sm:$0xf]
  %v490 = vld [vmem:[%s9 + $0x38] sm:$0xf]
  %v491 = vld [vmem:[%s9 + $0x3c] sm:$0xf]
  %v492 = vld [vmem:[%s10] sm:$0x1]
  %v494 = vlaneseq
  %v495 = vshrl.u32 %v494, 7
  %v496 = vsub.s32 0, %v495
  %v497 = vrot.slane %v492, %v496
  %v515 = vunpack.c.l.b16 %v476
  %v516 = vunpack.c.l.b16 %v477
  %v517 = vunpack.c.l.b16 %v478
  %v518 = vunpack.c.l.b16 %v479
  %v519 = vunpack.c.l.b16 %v480
  %v520 = vunpack.c.l.b16 %v481
  %v521 = vunpack.c.l.b16 %v482
  %v522 = vunpack.c.l.b16 %v483
  %v523 = vunpack.c.l.b16 %v484
  %v524 = vunpack.c.l.b16 %v485
  %v525 = vunpack.c.l.b16 %v486
  %v526 = vunpack.c.l.b16 %v487
  %v527 = vunpack.c.l.b16 %v488
  %v528 = vunpack.c.l.b16 %v489
  %v529 = vunpack.c.l.b16 %v490
  %v530 = vunpack.c.l.b16 %v491
  %v531 = vpack.c.b16 %v516, %v515
  %v532 = vpack.c.b16 %v518, %v517
  %v533 = vpack.c.b16 %v520, %v519
  %v534 = vpack.c.b16 %v522, %v521
  %v535 = vpack.c.b16 %v524, %v523
  %v536 = vpack.c.b16 %v526, %v525
  %v537 = vpack.c.b16 %v528, %v527
  %v538 = vpack.c.b16 %v530, %v529
  %547 = vmatprep.subr.bf16.mxu0 0
  %548 = vmatpush1.bf16.msra.mxu0 %v538
  %549 = vmatprep.subr.bf16.mxu0 0
  %550 = vmatpush1.bf16.msra.mxu0 %v537
  %551 = vmatprep.subr.bf16.mxu0 0
  %552 = vmatpush1.bf16.msra.mxu0 %v536
  %553 = vmatprep.subr.bf16.mxu0 0
  %554 = vmatpush1.bf16.msra.mxu0 %v535
  %555 = vmatprep.subr.bf16.mxu0 0
  %556 = vmatpush1.bf16.msra.mxu0 %v534
  %557 = vmatprep.subr.bf16.mxu0 0
  %558 = vmatpush1.bf16.msra.mxu0 %v533
  %559 = vmatprep.subr.bf16.mxu0 0
  %560 = vmatpush1.bf16.msra.mxu0 %v532
  %561 = vmatprep.subr.bf16.mxu0 0
  %562 = vmatpush1.bf16.msra.mxu0 %v531
  %563 = vmatprep.subr.bf16.mxu0 0
  %564 = vmatpush2.bf16.msra.mxu0 0
  %565 = vmatprep.subr.bf16.mxu0 0
  %566 = vmatpush2.bf16.msra.mxu0 0
  %567 = vmatprep.subr.bf16.mxu0 0
  %568 = vmatpush2.bf16.msra.mxu0 0
  %569 = vmatprep.subr.bf16.mxu0 0
  %570 = vmatpush2.bf16.msra.mxu0 0
  %571 = vmatprep.subr.bf16.mxu0 0
  %572 = vmatpush2.bf16.msra.mxu0 0
  %573 = vmatprep.subr.bf16.mxu0 0
  %574 = vmatpush2.bf16.msra.mxu0 0
  %575 = vmatprep.subr.bf16.mxu0 0
  %576 = vmatpush2.bf16.msra.mxu0 0
  %577 = vmatprep.subr.bf16.mxu0 0
  %578 = vmatpush2.bf16.msra.mxu0 0
  %579 = vmatprep.mubr.bf16.mxu0 0
  %580 = vmatmul.mubr.bf16.gmra.mxu0 %v475
  %v581 = vpop.f32.mrf.mxu0
  %v582 = vadd.f32 %v497, %v581
  %v583 = vpop.f32.mrf.mxu0
  %v584 = vpop.f32.mrf.mxu0
  %v585 = vadd.f32 %v497, %v584
  %v586 = vpop.f32.mrf.mxu0
  %587 = vdwg.mxu0
  %vm588 = vcmp.gt.f32.partialorder %v582, 0.0
  %vm589 = vcmp.gt.f32.partialorder %v585, 0.0
  %v590 = vmul.f32 %v582, 0.2
  %v591 = vmul.f32 %v585, 0.2
  %v592 = vsel %vm588, %v582, %v590
  %v593 = vsel %vm589, %v585, %v591
  %v594 = vpack.c.bf16 %v593, %v592
  %v595 = vld [vmem:[%s11] sm:$0xf]
  %v596 = vld [vmem:[%s11 + $0x4] sm:$0xf]
  %v597 = vld [vmem:[%s11 + $0x8] sm:$0xf]
  %v598 = vld [vmem:[%s11 + $0xc] sm:$0xf]
  %v599 = vld [vmem:[%s11 + $0x10] sm:$0xf]
  %v600 = vld [vmem:[%s11 + $0x14] sm:$0xf]
  %v601 = vld [vmem:[%s11 + $0x18] sm:$0xf]
  %v602 = vld [vmem:[%s11 + $0x1c] sm:$0xf]
  %v603 = vld [vmem:[%s11 + $0x20] sm:$0xf]
  %v604 = vld [vmem:[%s11 + $0x24] sm:$0xf]
  %v605 = vld [vmem:[%s11 + $0x28] sm:$0xf]
  %v606 = vld [vmem:[%s11 + $0x2c] sm:$0xf]
  %v607 = vld [vmem:[%s11 + $0x30] sm:$0xf]
  %v608 = vld [vmem:[%s11 + $0x34] sm:$0xf]
  %v609 = vld [vmem:[%s11 + $0x38] sm:$0xf]
  %v610 = vld [vmem:[%s11 + $0x3c] sm:$0xf]
  %v611 = vld [vmem:[%s12] sm:$0x1]
  %v613 = vlaneseq
  %v614 = vshrl.u32 %v613, 7
  %v615 = vsub.s32 0, %v614
  %v616 = vrot.slane %v611, %v615
  %v634 = vunpack.c.l.b16 %v595
  %v635 = vunpack.c.l.b16 %v596
  %v636 = vunpack.c.l.b16 %v597
  %v637 = vunpack.c.l.b16 %v598
  %v638 = vunpack.c.l.b16 %v599
  %v639 = vunpack.c.l.b16 %v600
  %v640 = vunpack.c.l.b16 %v601
  %v641 = vunpack.c.l.b16 %v602
  %v642 = vunpack.c.l.b16 %v603
  %v643 = vunpack.c.l.b16 %v604
  %v644 = vunpack.c.l.b16 %v605
  %v645 = vunpack.c.l.b16 %v606
  %v646 = vunpack.c.l.b16 %v607
  %v647 = vunpack.c.l.b16 %v608
  %v648 = vunpack.c.l.b16 %v609
  %v649 = vunpack.c.l.b16 %v610
  %v650 = vpack.c.b16 %v635, %v634
  %v651 = vpack.c.b16 %v637, %v636
  %v652 = vpack.c.b16 %v639, %v638
  %v653 = vpack.c.b16 %v641, %v640
  %v654 = vpack.c.b16 %v643, %v642
  %v655 = vpack.c.b16 %v645, %v644
  %v656 = vpack.c.b16 %v647, %v646
  %v657 = vpack.c.b16 %v649, %v648
  %666 = vmatprep.subr.bf16.mxu0 0
  %667 = vmatpush1.bf16.msra.mxu0 %v657
  %668 = vmatprep.subr.bf16.mxu0 0
  %669 = vmatpush1.bf16.msra.mxu0 %v656
  %670 = vmatprep.subr.bf16.mxu0 0
  %671 = vmatpush1.bf16.msra.mxu0 %v655
  %672 = vmatprep.subr.bf16.mxu0 0
  %673 = vmatpush1.bf16.msra.mxu0 %v654
  %674 = vmatprep.subr.bf16.mxu0 0
  %675 = vmatpush1.bf16.msra.mxu0 %v653
  %676 = vmatprep.subr.bf16.mxu0 0
  %677 = vmatpush1.bf16.msra.mxu0 %v652
  %678 = vmatprep.subr.bf16.mxu0 0
  %679 = vmatpush1.bf16.msra.mxu0 %v651
  %680 = vmatprep.subr.bf16.mxu0 0
  %681 = vmatpush1.bf16.msra.mxu0 %v650
  %682 = vmatprep.subr.bf16.mxu0 0
  %683 = vmatpush2.bf16.msra.mxu0 0
  %684 = vmatprep.subr.bf16.mxu0 0
  %685 = vmatpush2.bf16.msra.mxu0 0
  %686 = vmatprep.subr.bf16.mxu0 0
  %687 = vmatpush2.bf16.msra.mxu0 0
  %688 = vmatprep.subr.bf16.mxu0 0
  %689 = vmatpush2.bf16.msra.mxu0 0
  %690 = vmatprep.subr.bf16.mxu0 0
  %691 = vmatpush2.bf16.msra.mxu0 0
  %692 = vmatprep.subr.bf16.mxu0 0
  %693 = vmatpush2.bf16.msra.mxu0 0
  %694 = vmatprep.subr.bf16.mxu0 0
  %695 = vmatpush2.bf16.msra.mxu0 0
  %696 = vmatprep.subr.bf16.mxu0 0
  %697 = vmatpush2.bf16.msra.mxu0 0
  %698 = vmatprep.mubr.bf16.mxu0 0
  %699 = vmatmul.mubr.bf16.gmra.mxu0 %v594
  %v700 = vpop.f32.mrf.mxu0
  %v701 = vadd.f32 %v616, %v700
  %v702 = vpop.f32.mrf.mxu0
  %v703 = vpop.f32.mrf.mxu0
  %v704 = vadd.f32 %v616, %v703
  %v705 = vpop.f32.mrf.mxu0
  %706 = vdwg.mxu0
  %vm707 = vcmp.gt.f32.partialorder %v701, 0.0
  %vm708 = vcmp.gt.f32.partialorder %v704, 0.0
  %v709 = vmul.f32 %v701, 0.2
  %v710 = vmul.f32 %v704, 0.2
  %v711 = vsel %vm707, %v701, %v709
  %v712 = vsel %vm708, %v704, %v710
  %v713 = vpack.c.bf16 %v712, %v711
  %v714 = vld [vmem:[%s13] sm:$0xf]
  %v715 = vld [vmem:[%s13 + $0x4] sm:$0xf]
  %v716 = vld [vmem:[%s13 + $0x8] sm:$0xf]
  %v717 = vld [vmem:[%s13 + $0xc] sm:$0xf]
  %v718 = vld [vmem:[%s13 + $0x10] sm:$0xf]
  %v719 = vld [vmem:[%s13 + $0x14] sm:$0xf]
  %v720 = vld [vmem:[%s13 + $0x18] sm:$0xf]
  %v721 = vld [vmem:[%s13 + $0x1c] sm:$0xf]
  %v722 = vld [vmem:[%s13 + $0x20] sm:$0xf]
  %v723 = vld [vmem:[%s13 + $0x24] sm:$0xf]
  %v724 = vld [vmem:[%s13 + $0x28] sm:$0xf]
  %v725 = vld [vmem:[%s13 + $0x2c] sm:$0xf]
  %v726 = vld [vmem:[%s13 + $0x30] sm:$0xf]
  %v727 = vld [vmem:[%s13 + $0x34] sm:$0xf]
  %v728 = vld [vmem:[%s13 + $0x38] sm:$0xf]
  %v729 = vld [vmem:[%s13 + $0x3c] sm:$0xf]
  %v730 = vld [vmem:[%s14] sm:$0x1]
  %v732 = vlaneseq
  %v733 = vshrl.u32 %v732, 7
  %v734 = vsub.s32 0, %v733
  %v735 = vrot.slane %v730, %v734
  %v753 = vunpack.c.l.b16 %v714
  %v754 = vunpack.c.l.b16 %v715
  %v755 = vunpack.c.l.b16 %v716
  %v756 = vunpack.c.l.b16 %v717
  %v757 = vunpack.c.l.b16 %v718
  %v758 = vunpack.c.l.b16 %v719
  %v759 = vunpack.c.l.b16 %v720
  %v760 = vunpack.c.l.b16 %v721
  %v761 = vunpack.c.l.b16 %v722
  %v762 = vunpack.c.l.b16 %v723
  %v763 = vunpack.c.l.b16 %v724
  %v764 = vunpack.c.l.b16 %v725
  %v765 = vunpack.c.l.b16 %v726
  %v766 = vunpack.c.l.b16 %v727
  %v767 = vunpack.c.l.b16 %v728
  %v768 = vunpack.c.l.b16 %v729
  %v769 = vpack.c.b16 %v754, %v753
  %v770 = vpack.c.b16 %v756, %v755
  %v771 = vpack.c.b16 %v758, %v757
  %v772 = vpack.c.b16 %v760, %v759
  %v773 = vpack.c.b16 %v762, %v761
  %v774 = vpack.c.b16 %v764, %v763
  %v775 = vpack.c.b16 %v766, %v765
  %v776 = vpack.c.b16 %v768, %v767
  %785 = vmatprep.subr.bf16.mxu0 0
  %786 = vmatpush1.bf16.msra.mxu0 %v776
  %787 = vmatprep.subr.bf16.mxu0 0
  %788 = vmatpush1.bf16.msra.mxu0 %v775
  %789 = vmatprep.subr.bf16.mxu0 0
  %790 = vmatpush1.bf16.msra.mxu0 %v774
  %791 = vmatprep.subr.bf16.mxu0 0
  %792 = vmatpush1.bf16.msra.mxu0 %v773
  %793 = vmatprep.subr.bf16.mxu0 0
  %794 = vmatpush1.bf16.msra.mxu0 %v772
  %795 = vmatprep.subr.bf16.mxu0 0
  %796 = vmatpush1.bf16.msra.mxu0 %v771
  %797 = vmatprep.subr.bf16.mxu0 0
  %798 = vmatpush1.bf16.msra.mxu0 %v770
  %799 = vmatprep.subr.bf16.mxu0 0
  %800 = vmatpush1.bf16.msra.mxu0 %v769
  %801 = vmatprep.subr.bf16.mxu0 0
  %802 = vmatpush2.bf16.msra.mxu0 0
  %803 = vmatprep.subr.bf16.mxu0 0
  %804 = vmatpush2.bf16.msra.mxu0 0
  %805 = vmatprep.subr.bf16.mxu0 0
  %806 = vmatpush2.bf16.msra.mxu0 0
  %807 = vmatprep.subr.bf16.mxu0 0
  %808 = vmatpush2.bf16.msra.mxu0 0
  %809 = vmatprep.subr.bf16.mxu0 0
  %810 = vmatpush2.bf16.msra.mxu0 0
  %811 = vmatprep.subr.bf16.mxu0 0
  %812 = vmatpush2.bf16.msra.mxu0 0
  %813 = vmatprep.subr.bf16.mxu0 0
  %814 = vmatpush2.bf16.msra.mxu0 0
  %815 = vmatprep.subr.bf16.mxu0 0
  %816 = vmatpush2.bf16.msra.mxu0 0
  %817 = vmatprep.mubr.bf16.mxu0 0
  %818 = vmatmul.mubr.bf16.gmra.mxu0 %v713
  %v819 = vpop.f32.mrf.mxu0
  %v820 = vadd.f32 %v735, %v819
  %v821 = vpop.f32.mrf.mxu0
  %v822 = vpop.f32.mrf.mxu0
  %v823 = vadd.f32 %v735, %v822
  %v824 = vpop.f32.mrf.mxu0
  %825 = vdwg.mxu0
  %v826 = vmax.f32 %v820, 0.0
  %v827 = vmax.f32 %v823, 0.0
  %v828 = vld [vmem:[%s15] sm:$0xf]
  %v829 = vld [vmem:[%s15 + $0x4] sm:$0xf]
  %v830 = vld [vmem:[%s15 + $0x8] sm:$0xf]
  %v831 = vld [vmem:[%s15 + $0xc] sm:$0xf]
  %v832 = vld [vmem:[%s15 + $0x10] sm:$0xf]
  %v833 = vld [vmem:[%s15 + $0x14] sm:$0xf]
  %v834 = vld [vmem:[%s15 + $0x18] sm:$0xf]
  %v835 = vld [vmem:[%s15 + $0x1c] sm:$0xf]
  %v836 = vld [vmem:[%s15 + $0x20] sm:$0xf]
  %v837 = vld [vmem:[%s15 + $0x24] sm:$0xf]
  %v838 = vld [vmem:[%s15 + $0x28] sm:$0xf]
  %v839 = vld [vmem:[%s15 + $0x2c] sm:$0xf]
  %v840 = vld [vmem:[%s15 + $0x30] sm:$0xf]
  %v841 = vld [vmem:[%s15 + $0x34] sm:$0xf]
  %v842 = vld [vmem:[%s15 + $0x38] sm:$0xf]
  %v843 = vld [vmem:[%s15 + $0x3c] sm:$0xf]
  %v844 = vpack.c.bf16 %v827, %v826
  %845 = vmatprep.subr.bf16.mxu0 0
  %846 = vmatpush1.bf16.msra.mxu0 0
  %847 = vmatprep.subr.bf16.mxu0 0
  %848 = vmatpush1.bf16.msra.mxu0 0
  %849 = vmatprep.subr.bf16.mxu0 0
  %850 = vmatpush1.bf16.msra.mxu0 0
  %851 = vmatprep.subr.bf16.mxu0 0
  %852 = vmatpush1.bf16.msra.mxu0 0
  %853 = vmatprep.subr.bf16.mxu0 0
  %854 = vmatpush1.bf16.msra.mxu0 0
  %855 = vmatprep.subr.bf16.mxu0 0
  %856 = vmatpush1.bf16.msra.mxu0 0
  %857 = vmatprep.subr.bf16.mxu0 0
  %858 = vmatpush1.bf16.msra.mxu0 0
  %859 = vmatprep.subr.bf16.mxu0 0
  %860 = vmatpush1.bf16.msra.mxu0 %v844
  %861 = vmatprep.subr.bf16.mxu0 0
  %862 = vmatpush2.bf16.msra.mxu0 0
  %863 = vmatprep.subr.bf16.mxu0 0
  %864 = vmatpush2.bf16.msra.mxu0 0
  %865 = vmatprep.subr.bf16.mxu0 0
  %866 = vmatpush2.bf16.msra.mxu0 0
  %867 = vmatprep.subr.bf16.mxu0 0
  %868 = vmatpush2.bf16.msra.mxu0 0
  %869 = vmatprep.subr.bf16.mxu0 0
  %870 = vmatpush2.bf16.msra.mxu0 0
  %871 = vmatprep.subr.bf16.mxu0 0
  %872 = vmatpush2.bf16.msra.mxu0 0
  %873 = vmatprep.subr.bf16.mxu0 0
  %874 = vmatpush2.bf16.msra.mxu0 0
  %875 = vmatprep.subr.bf16.mxu0 0
  %876 = vmatpush2.bf16.msra.mxu0 0
  %877 = vmatprep.mubr.bf16.mxu0 0
  %878 = vmatmul.mubr.bf16.gmra.mxu0 %v216
  %v879 = vpop.f32.mrf.mxu0
  %v880 = vadd.f32 0.0, %v879
  %v881 = vpop.f32.mrf.mxu0
  %v882 = vpop.f32.mrf.mxu0
  %v883 = vadd.f32 0.0, %v882
  %v884 = vpop.f32.mrf.mxu0
  %885 = vdwg.mxu0
  %v886 = vpack.c.bf16 %v883, %v880
  %v887 = vld [vmem:[%s16] sm:$0x1]
  %v889 = vlaneseq
  %v890 = vshrl.u32 %v889, 7
  %v891 = vsub.s32 0, %v890
  %v892 = vrot.slane %v887, %v891
  %v910 = vunpack.c.l.b16 %v828
  %v911 = vunpack.c.l.b16 %v829
  %v912 = vunpack.c.l.b16 %v830
  %v913 = vunpack.c.l.b16 %v831
  %v914 = vunpack.c.l.b16 %v832
  %v915 = vunpack.c.l.b16 %v833
  %v916 = vunpack.c.l.b16 %v834
  %v917 = vunpack.c.l.b16 %v835
  %v918 = vunpack.c.l.b16 %v836
  %v919 = vunpack.c.l.b16 %v837
  %v920 = vunpack.c.l.b16 %v838
  %v921 = vunpack.c.l.b16 %v839
  %v922 = vunpack.c.l.b16 %v840
  %v923 = vunpack.c.l.b16 %v841
  %v924 = vunpack.c.l.b16 %v842
  %v925 = vunpack.c.l.b16 %v843
  %v926 = vpack.c.b16 %v911, %v910
  %v927 = vpack.c.b16 %v913, %v912
  %v928 = vpack.c.b16 %v915, %v914
  %v929 = vpack.c.b16 %v917, %v916
  %v930 = vpack.c.b16 %v919, %v918
  %v931 = vpack.c.b16 %v921, %v920
  %v932 = vpack.c.b16 %v923, %v922
  %v933 = vpack.c.b16 %v925, %v924
  %942 = vmatprep.subr.bf16.mxu0 0
  %943 = vmatpush1.bf16.msra.mxu0 %v933
  %944 = vmatprep.subr.bf16.mxu0 0
  %945 = vmatpush1.bf16.msra.mxu0 %v932
  %946 = vmatprep.subr.bf16.mxu0 0
  %947 = vmatpush1.bf16.msra.mxu0 %v931
  %948 = vmatprep.subr.bf16.mxu0 0
  %949 = vmatpush1.bf16.msra.mxu0 %v930
  %950 = vmatprep.subr.bf16.mxu0 0
  %951 = vmatpush1.bf16.msra.mxu0 %v929
  %952 = vmatprep.subr.bf16.mxu0 0
  %953 = vmatpush1.bf16.msra.mxu0 %v928
  %954 = vmatprep.subr.bf16.mxu0 0
  %955 = vmatpush1.bf16.msra.mxu0 %v927
  %956 = vmatprep.subr.bf16.mxu0 0
  %957 = vmatpush1.bf16.msra.mxu0 %v926
  %958 = vmatprep.subr.bf16.mxu0 0
  %959 = vmatpush2.bf16.msra.mxu0 0
  %960 = vmatprep.subr.bf16.mxu0 0
  %961 = vmatpush2.bf16.msra.mxu0 0
  %962 = vmatprep.subr.bf16.mxu0 0
  %963 = vmatpush2.bf16.msra.mxu0 0
  %964 = vmatprep.subr.bf16.mxu0 0
  %965 = vmatpush2.bf16.msra.mxu0 0
  %966 = vmatprep.subr.bf16.mxu0 0
  %967 = vmatpush2.bf16.msra.mxu0 0
  %968 = vmatprep.subr.bf16.mxu0 0
  %969 = vmatpush2.bf16.msra.mxu0 0
  %970 = vmatprep.subr.bf16.mxu0 0
  %971 = vmatpush2.bf16.msra.mxu0 0
  %972 = vmatprep.subr.bf16.mxu0 0
  %973 = vmatpush2.bf16.msra.mxu0 0
  %974 = vmatprep.mubr.bf16.mxu0 0
  %975 = vmatmul.mubr.bf16.gmra.mxu0 %v886
  %v976 = vpop.f32.mrf.mxu0
  %v977 = vadd.f32 %v892, %v976
  %v978 = vpop.f32.mrf.mxu0
  %v979 = vpop.f32.mrf.mxu0
  %v980 = vadd.f32 %v892, %v979
  %v981 = vpop.f32.mrf.mxu0
  %982 = vdwg.mxu0
  %v983 = vadd.f32 %v977, %v826
  %v984 = vadd.f32 %v980, %v827
  %v985 = vmax.f32 %v983, 0.0
  %v986 = vmax.f32 %v984, 0.0
  %v987 = vpack.c.bf16 %v986, %v985
  %v988 = vld [vmem:[%s17] sm:$0xf]
  %v989 = vld [vmem:[%s17 + $0x4] sm:$0xf]
  %v990 = vld [vmem:[%s17 + $0x8] sm:$0xf]
  %v991 = vld [vmem:[%s17 + $0xc] sm:$0xf]
  %v992 = vld [vmem:[%s17 + $0x10] sm:$0xf]
  %v993 = vld [vmem:[%s17 + $0x14] sm:$0xf]
  %v994 = vld [vmem:[%s17 + $0x18] sm:$0xf]
  %v995 = vld [vmem:[%s17 + $0x1c] sm:$0xf]
  %v996 = vld [vmem:[%s17 + $0x20] sm:$0xf]
  %v997 = vld [vmem:[%s17 + $0x24] sm:$0xf]
  %v998 = vld [vmem:[%s17 + $0x28] sm:$0xf]
  %v999 = vld [vmem:[%s17 + $0x2c] sm:$0xf]
  %v1000 = vld [vmem:[%s17 + $0x30] sm:$0xf]
  %v1001 = vld [vmem:[%s17 + $0x34] sm:$0xf]
  %v1002 = vld [vmem:[%s17 + $0x38] sm:$0xf]
  %v1003 = vld [vmem:[%s17 + $0x3c] sm:$0xf]
  %v1004 = vld [vmem:[%s18] sm:$0x1]
  %v1006 = vlaneseq
  %v1007 = vshrl.u32 %v1006, 7
  %v1008 = vsub.s32 0, %v1007
  %v1009 = vrot.slane %v1004, %v1008
  %v1027 = vunpack.c.l.b16 %v988
  %v1028 = vunpack.c.l.b16 %v989
  %v1029 = vunpack.c.l.b16 %v990
  %v1030 = vunpack.c.l.b16 %v991
  %v1031 = vunpack.c.l.b16 %v992
  %v1032 = vunpack.c.l.b16 %v993
  %v1033 = vunpack.c.l.b16 %v994
  %v1034 = vunpack.c.l.b16 %v995
  %v1035 = vunpack.c.l.b16 %v996
  %v1036 = vunpack.c.l.b16 %v997
  %v1037 = vunpack.c.l.b16 %v998
  %v1038 = vunpack.c.l.b16 %v999
  %v1039 = vunpack.c.l.b16 %v1000
  %v1040 = vunpack.c.l.b16 %v1001
  %v1041 = vunpack.c.l.b16 %v1002
  %v1042 = vunpack.c.l.b16 %v1003
  %v1043 = vpack.c.b16 %v1028, %v1027
  %v1044 = vpack.c.b16 %v1030, %v1029
  %v1045 = vpack.c.b16 %v1032, %v1031
  %v1046 = vpack.c.b16 %v1034, %v1033
  %v1047 = vpack.c.b16 %v1036, %v1035
  %v1048 = vpack.c.b16 %v1038, %v1037
  %v1049 = vpack.c.b16 %v1040, %v1039
  %v1050 = vpack.c.b16 %v1042, %v1041
  %1059 = vmatprep.subr.bf16.mxu0 0
  %1060 = vmatpush1.bf16.msra.mxu0 %v1050
  %1061 = vmatprep.subr.bf16.mxu0 0
  %1062 = vmatpush1.bf16.msra.mxu0 %v1049
  %1063 = vmatprep.subr.bf16.mxu0 0
  %1064 = vmatpush1.bf16.msra.mxu0 %v1048
  %1065 = vmatprep.subr.bf16.mxu0 0
  %1066 = vmatpush1.bf16.msra.mxu0 %v1047
  %1067 = vmatprep.subr.bf16.mxu0 0
  %1068 = vmatpush1.bf16.msra.mxu0 %v1046
  %1069 = vmatprep.subr.bf16.mxu0 0
  %1070 = vmatpush1.bf16.msra.mxu0 %v1045
  %1071 = vmatprep.subr.bf16.mxu0 0
  %1072 = vmatpush1.bf16.msra.mxu0 %v1044
  %1073 = vmatprep.subr.bf16.mxu0 0
  %1074 = vmatpush1.bf16.msra.mxu0 %v1043
  %1075 = vmatprep.subr.bf16.mxu0 0
  %1076 = vmatpush2.bf16.msra.mxu0 0
  %1077 = vmatprep.subr.bf16.mxu0 0
  %1078 = vmatpush2.bf16.msra.mxu0 0
  %1079 = vmatprep.subr.bf16.mxu0 0
  %1080 = vmatpush2.bf16.msra.mxu0 0
  %1081 = vmatprep.subr.bf16.mxu0 0
  %1082 = vmatpush2.bf16.msra.mxu0 0
  %1083 = vmatprep.subr.bf16.mxu0 0
  %1084 = vmatpush2.bf16.msra.mxu0 0
  %1085 = vmatprep.subr.bf16.mxu0 0
  %1086 = vmatpush2.bf16.msra.mxu0 0
  %1087 = vmatprep.subr.bf16.mxu0 0
  %1088 = vmatpush2.bf16.msra.mxu0 0
  %1089 = vmatprep.subr.bf16.mxu0 0
  %1090 = vmatpush2.bf16.msra.mxu0 0
  %1091 = vmatprep.mubr.bf16.mxu0 0
  %1092 = vmatmul.mubr.bf16.gmra.mxu0 %v987
  %v1093 = vpop.f32.mrf.mxu0
  %v1094 = vadd.f32 %v1009, %v1093
  %v1095 = vpop.f32.mrf.mxu0
  %v1096 = vpop.f32.mrf.mxu0
  %v1097 = vadd.f32 %v1009, %v1096
  %v1098 = vpop.f32.mrf.mxu0
  %1099 = vdwg.mxu0
  %v1100 = vld [vmem:[%s19] sm:$0xf]
  %v1101 = vld [vmem:[%s19 + $0x4] sm:$0xf]
  %v1102 = vld [vmem:[%s19 + $0x8] sm:$0xf]
  %v1103 = vld [vmem:[%s19 + $0xc] sm:$0xf]
  %v1104 = vld [vmem:[%s19 + $0x10] sm:$0xf]
  %v1105 = vld [vmem:[%s19 + $0x14] sm:$0xf]
  %v1106 = vld [vmem:[%s19 + $0x18] sm:$0xf]
  %v1107 = vld [vmem:[%s19 + $0x1c] sm:$0xf]
  %v1108 = vld [vmem:[%s19 + $0x20] sm:$0xf]
  %v1109 = vld [vmem:[%s19 + $0x24] sm:$0xf]
  %v1110 = vld [vmem:[%s19 + $0x28] sm:$0xf]
  %v1111 = vld [vmem:[%s19 + $0x2c] sm:$0xf]
  %v1112 = vld [vmem:[%s19 + $0x30] sm:$0xf]
  %v1113 = vld [vmem:[%s19 + $0x34] sm:$0xf]
  %v1114 = vld [vmem:[%s19 + $0x38] sm:$0xf]
  %v1115 = vld [vmem:[%s19 + $0x3c] sm:$0xf]
  %v1116 = vpack.c.bf16 %v1097, %v1094
  %1117 = vmatprep.subr.bf16.mxu0 0
  %1118 = vmatpush1.bf16.msra.mxu0 0
  %1119 = vmatprep.subr.bf16.mxu0 0
  %1120 = vmatpush1.bf16.msra.mxu0 0
  %1121 = vmatprep.subr.bf16.mxu0 0
  %1122 = vmatpush1.bf16.msra.mxu0 0
  %1123 = vmatprep.subr.bf16.mxu0 0
  %1124 = vmatpush1.bf16.msra.mxu0 0
  %1125 = vmatprep.subr.bf16.mxu0 0
  %1126 = vmatpush1.bf16.msra.mxu0 0
  %1127 = vmatprep.subr.bf16.mxu0 0
  %1128 = vmatpush1.bf16.msra.mxu0 0
  %1129 = vmatprep.subr.bf16.mxu0 0
  %1130 = vmatpush1.bf16.msra.mxu0 0
  %1131 = vmatprep.subr.bf16.mxu0 0
  %1132 = vmatpush1.bf16.msra.mxu0 %v1116
  %1133 = vmatprep.subr.bf16.mxu0 0
  %1134 = vmatpush2.bf16.msra.mxu0 0
  %1135 = vmatprep.subr.bf16.mxu0 0
  %1136 = vmatpush2.bf16.msra.mxu0 0
  %1137 = vmatprep.subr.bf16.mxu0 0
  %1138 = vmatpush2.bf16.msra.mxu0 0
  %1139 = vmatprep.subr.bf16.mxu0 0
  %1140 = vmatpush2.bf16.msra.mxu0 0
  %1141 = vmatprep.subr.bf16.mxu0 0
  %1142 = vmatpush2.bf16.msra.mxu0 0
  %1143 = vmatprep.subr.bf16.mxu0 0
  %1144 = vmatpush2.bf16.msra.mxu0 0
  %1145 = vmatprep.subr.bf16.mxu0 0
  %1146 = vmatpush2.bf16.msra.mxu0 0
  %1147 = vmatprep.subr.bf16.mxu0 0
  %1148 = vmatpush2.bf16.msra.mxu0 0
  %1149 = vmatprep.mubr.bf16.mxu0 0
  %1150 = vmatmul.mubr.bf16.gmra.mxu0 %v216
  %v1151 = vpop.f32.mrf.mxu0
  %v1152 = vadd.f32 0.0, %v1151
  %v1153 = vpop.f32.mrf.mxu0
  %v1154 = vpop.f32.mrf.mxu0
  %v1155 = vadd.f32 0.0, %v1154
  %v1156 = vpop.f32.mrf.mxu0
  %1157 = vdwg.mxu0
  %v1158 = vpack.c.bf16 %v1155, %v1152
  %v1159 = vld [vmem:[%s20] sm:$0x1]
  %v1161 = vlaneseq
  %v1162 = vshrl.u32 %v1161, 7
  %v1163 = vsub.s32 0, %v1162
  %v1164 = vrot.slane %v1159, %v1163
  %v1182 = vunpack.c.l.b16 %v1100
  %v1183 = vunpack.c.l.b16 %v1101
  %v1184 = vunpack.c.l.b16 %v1102
  %v1185 = vunpack.c.l.b16 %v1103
  %v1186 = vunpack.c.l.b16 %v1104
  %v1187 = vunpack.c.l.b16 %v1105
  %v1188 = vunpack.c.l.b16 %v1106
  %v1189 = vunpack.c.l.b16 %v1107
  %v1190 = vunpack.c.l.b16 %v1108
  %v1191 = vunpack.c.l.b16 %v1109
  %v1192 = vunpack.c.l.b16 %v1110
  %v1193 = vunpack.c.l.b16 %v1111
  %v1194 = vunpack.c.l.b16 %v1112
  %v1195 = vunpack.c.l.b16 %v1113
  %v1196 = vunpack.c.l.b16 %v1114
  %v1197 = vunpack.c.l.b16 %v1115
  %v1198 = vpack.c.b16 %v1183, %v1182
  %v1199 = vpack.c.b16 %v1185, %v1184
  %v1200 = vpack.c.b16 %v1187, %v1186
  %v1201 = vpack.c.b16 %v1189, %v1188
  %v1202 = vpack.c.b16 %v1191, %v1190
  %v1203 = vpack.c.b16 %v1193, %v1192
  %v1204 = vpack.c.b16 %v1195, %v1194
  %v1205 = vpack.c.b16 %v1197, %v1196
  %1214 = vmatprep.subr.bf16.mxu0 0
  %1215 = vmatpush1.bf16.msra.mxu0 %v1205
  %1216 = vmatprep.subr.bf16.mxu0 0
  %1217 = vmatpush1.bf16.msra.mxu0 %v1204
  %1218 = vmatprep.subr.bf16.mxu0 0
  %1219 = vmatpush1.bf16.msra.mxu0 %v1203
  %1220 = vmatprep.subr.bf16.mxu0 0
  %1221 = vmatpush1.bf16.msra.mxu0 %v1202
  %1222 = vmatprep.subr.bf16.mxu0 0
  %1223 = vmatpush1.bf16.msra.mxu0 %v1201
  %1224 = vmatprep.subr.bf16.mxu0 0
  %1225 = vmatpush1.bf16.msra.mxu0 %v1200
  %1226 = vmatprep.subr.bf16.mxu0 0
  %1227 = vmatpush1.bf16.msra.mxu0 %v1199
  %1228 = vmatprep.subr.bf16.mxu0 0
  %1229 = vmatpush1.bf16.msra.mxu0 %v1198
  %1230 = vmatprep.subr.bf16.mxu0 0
  %1231 = vmatpush2.bf16.msra.mxu0 0
  %1232 = vmatprep.subr.bf16.mxu0 0
  %1233 = vmatpush2.bf16.msra.mxu0 0
  %1234 = vmatprep.subr.bf16.mxu0 0
  %1235 = vmatpush2.bf16.msra.mxu0 0
  %1236 = vmatprep.subr.bf16.mxu0 0
  %1237 = vmatpush2.bf16.msra.mxu0 0
  %1238 = vmatprep.subr.bf16.mxu0 0
  %1239 = vmatpush2.bf16.msra.mxu0 0
  %1240 = vmatprep.subr.bf16.mxu0 0
  %1241 = vmatpush2.bf16.msra.mxu0 0
  %1242 = vmatprep.subr.bf16.mxu0 0
  %1243 = vmatpush2.bf16.msra.mxu0 0
  %1244 = vmatprep.subr.bf16.mxu0 0
  %1245 = vmatpush2.bf16.msra.mxu0 0
  %1246 = vmatprep.mubr.bf16.mxu0 0
  %1247 = vmatmul.mubr.bf16.gmra.mxu0 %v1158
  %v1248 = vpop.f32.mrf.mxu0
  %v1249 = vadd.f32 %v1164, %v1248
  %v1250 = vpop.f32.mrf.mxu0
  %v1251 = vpop.f32.mrf.mxu0
  %v1252 = vadd.f32 %v1164, %v1251
  %v1253 = vpop.f32.mrf.mxu0
  %1254 = vdwg.mxu0
  %v1255 = vpack.c.bf16 %v1252, %v1249
  %v1256 = vld [vmem:[%s21] sm:$0xf]
  %v1257 = vld [vmem:[%s21 + $0x4] sm:$0xf]
  %v1258 = vld [vmem:[%s21 + $0x8] sm:$0xf]
  %v1259 = vld [vmem:[%s21 + $0xc] sm:$0xf]
  %v1260 = vld [vmem:[%s21 + $0x10] sm:$0xf]
  %v1261 = vld [vmem:[%s21 + $0x14] sm:$0xf]
  %v1262 = vld [vmem:[%s21 + $0x18] sm:$0xf]
  %v1263 = vld [vmem:[%s21 + $0x1c] sm:$0xf]
  %v1264 = vld [vmem:[%s21 + $0x20] sm:$0xf]
  %v1265 = vld [vmem:[%s21 + $0x24] sm:$0xf]
  %v1266 = vld [vmem:[%s21 + $0x28] sm:$0xf]
  %v1267 = vld [vmem:[%s21 + $0x2c] sm:$0xf]
  %v1268 = vld [vmem:[%s21 + $0x30] sm:$0xf]
  %v1269 = vld [vmem:[%s21 + $0x34] sm:$0xf]
  %v1270 = vld [vmem:[%s21 + $0x38] sm:$0xf]
  %v1271 = vld [vmem:[%s21 + $0x3c] sm:$0xf]
  %v1272 = vld [vmem:[%s22] sm:$0x1]
  %v1274 = vlaneseq
  %v1275 = vshrl.u32 %v1274, 7
  %v1276 = vsub.s32 0, %v1275
  %v1277 = vrot.slane %v1272, %v1276
  %v1295 = vunpack.c.l.b16 %v1256
  %v1296 = vunpack.c.l.b16 %v1257
  %v1297 = vunpack.c.l.b16 %v1258
  %v1298 = vunpack.c.l.b16 %v1259
  %v1299 = vunpack.c.l.b16 %v1260
  %v1300 = vunpack.c.l.b16 %v1261
  %v1301 = vunpack.c.l.b16 %v1262
  %v1302 = vunpack.c.l.b16 %v1263
  %v1303 = vunpack.c.l.b16 %v1264
  %v1304 = vunpack.c.l.b16 %v1265
  %v1305 = vunpack.c.l.b16 %v1266
  %v1306 = vunpack.c.l.b16 %v1267
  %v1307 = vunpack.c.l.b16 %v1268
  %v1308 = vunpack.c.l.b16 %v1269
  %v1309 = vunpack.c.l.b16 %v1270
  %v1310 = vunpack.c.l.b16 %v1271
  %v1311 = vpack.c.b16 %v1296, %v1295
  %v1312 = vpack.c.b16 %v1298, %v1297
  %v1313 = vpack.c.b16 %v1300, %v1299
  %v1314 = vpack.c.b16 %v1302, %v1301
  %v1315 = vpack.c.b16 %v1304, %v1303
  %v1316 = vpack.c.b16 %v1306, %v1305
  %v1317 = vpack.c.b16 %v1308, %v1307
  %v1318 = vpack.c.b16 %v1310, %v1309
  %1327 = vmatprep.subr.bf16.mxu0 0
  %1328 = vmatpush1.bf16.msra.mxu0 %v1318
  %1329 = vmatprep.subr.bf16.mxu0 0
  %1330 = vmatpush1.bf16.msra.mxu0 %v1317
  %1331 = vmatprep.subr.bf16.mxu0 0
  %1332 = vmatpush1.bf16.msra.mxu0 %v1316
  %1333 = vmatprep.subr.bf16.mxu0 0
  %1334 = vmatpush1.bf16.msra.mxu0 %v1315
  %1335 = vmatprep.subr.bf16.mxu0 0
  %1336 = vmatpush1.bf16.msra.mxu0 %v1314
  %1337 = vmatprep.subr.bf16.mxu0 0
  %1338 = vmatpush1.bf16.msra.mxu0 %v1313
  %1339 = vmatprep.subr.bf16.mxu0 0
  %1340 = vmatpush1.bf16.msra.mxu0 %v1312
  %1341 = vmatprep.subr.bf16.mxu0 0
  %1342 = vmatpush1.bf16.msra.mxu0 %v1311
  %1343 = vmatprep.subr.bf16.mxu0 0
  %1344 = vmatpush2.bf16.msra.mxu0 0
  %1345 = vmatprep.subr.bf16.mxu0 0
  %1346 = vmatpush2.bf16.msra.mxu0 0
  %1347 = vmatprep.subr.bf16.mxu0 0
  %1348 = vmatpush2.bf16.msra.mxu0 0
  %1349 = vmatprep.subr.bf16.mxu0 0
  %1350 = vmatpush2.bf16.msra.mxu0 0
  %1351 = vmatprep.subr.bf16.mxu0 0
  %1352 = vmatpush2.bf16.msra.mxu0 0
  %1353 = vmatprep.subr.bf16.mxu0 0
  %1354 = vmatpush2.bf16.msra.mxu0 0
  %1355 = vmatprep.subr.bf16.mxu0 0
  %1356 = vmatpush2.bf16.msra.mxu0 0
  %1357 = vmatprep.subr.bf16.mxu0 0
  %1358 = vmatpush2.bf16.msra.mxu0 0
  %1359 = vmatprep.mubr.bf16.mxu0 0
  %1360 = vmatmul.mubr.bf16.gmra.mxu0 %v1255
  %v1361 = vpop.f32.mrf.mxu0
  %v1362 = vadd.f32 %v1277, %v1361
  %v1363 = vpop.f32.mrf.mxu0
  %v1364 = vpop.f32.mrf.mxu0
  %v1365 = vadd.f32 %v1277, %v1364
  %v1366 = vpop.f32.mrf.mxu0
  %1367 = vdwg.mxu0
  %1368 = vst [vmem:[%s23] sm:$0xff] %v1362
  %1369 = vst [vmem:[%s23 + $0x8] sm:$0xff] %v1365
  // Predicated region
  $region94: #{gcn_d_forward.1} parent=0 // pred_check
    _
  $region95: #{gcn_d_forward.1} parent=0 // pred_check_branch
    %1371 = sbr.rel (0) target = $region97
  $region96: #{gcn_d_forward.1} parent=0 // pred_region
    _
  $region97: #{gcn_d_forward.1} parent=0 // pred_fallthru
    _
  // Predicated region
  $region98: #{gcn_d_forward.1} parent=0 // pred_check
    _
  $region99: #{gcn_d_forward.1} parent=0 // pred_check_branch
    %1373 = sbr.rel (0) target = $region101
  $region100: #{gcn_d_forward.1} parent=0 // pred_region
    _
  $region101: #{gcn_d_forward.1} parent=0 // pred_fallthru
    _

</llo_original>
